<compile_context>
chip_gen: v6e
topology: v6e:2x2x1
jax: 0.10.0
libtpu: 0.0.40
codegen_flags: <defaults>
</compile_context>

<pallas_src>
import jax
import jax.numpy as jnp
from jax.experimental import pallas as pl
from jax.experimental.pallas import tpu as pltpu


def _decoder_kernel(ids_ref,             # SMEM (B,) int32   [scalar prefetch]
                    emb_hbm,             # HBM  (V, H) f32   (memory_space=pl.ANY)
                    h0_ref, c0_ref,      # VMEM (L, B, H) f32
                    w_ref,               # VMEM (L, 2H, 4H) bf16  fused [x;h] gate weights
                    b_ref,               # VMEM (L, 1, 4H) f32    b_ih + b_hh
                    wlin_ref, blin_ref,  # VMEM (H, tv) bf16 / (1, tv) f32
                    probs_ref,           # out  (B, V) f32  resident block (logits, then probs)
                    hn_ref, cn_ref,      # out  (L, B, H) f32 resident blocks
                    emb_buf,             # VMEM (B, H) f32  scratch (gathered embedding rows)
                    x_scr,               # VMEM (B, H) bf16 scratch (top-layer hidden)
                    m_scr, s_scr,        # VMEM (B, 1) f32  scratch (online-softmax stats)
                    sem):                # DMA semaphores (B,)
    j = pl.program_id(0)
    n_v = pl.num_programs(0)
    L, B, H = h0_ref.shape
    V = emb_hbm.shape[0]
    tv = wlin_ref.shape[1]

    # ---- One-time work (first vocab tile): embedding gather + stacked LSTM ----
    @pl.when(j == 0)
    def _():
        # Embedding lookup via DMA row gather (no one-hot matmul, no full-table DMA).
        # NOTE: ids are clamped to [0, V-1]; PyTorch's nn.Embedding would raise on OOB ids.
        copies = []
        for bi in range(B):                              # B is static
            row = jnp.clip(ids_ref[bi], 0, V - 1)
            cp = pltpu.make_async_copy(emb_hbm.at[row], emb_buf.at[bi], sem.at[bi])
            cp.start()
            copies.append(cp)
        for cp in copies:                                # wait on the SAME descriptors
            cp.wait()

        # Stacked LSTM, one time step per layer.  Single fused matmul per layer:
        # [x ; h] (B,2H) @ W (2H,4H) -> gates (B,4H), gate order (i, f, o, g).
        # TODO(synk): for large H*L, stream per-layer weights (grid axis over L) or use
        # pipeline_mode=pl.Buffered(1) on the constant-index specs so v7x's 64 MiB VMEM holds.
        x = emb_buf[...]                                 # (B, H) f32
        for l in range(L):                               # L is static
            h = h0_ref[l]                                # (B, H)
            c = c0_ref[l]
            xh = jnp.concatenate([x, h], axis=1).astype(jnp.bfloat16)      # (B, 2H)
            gates = (jnp.dot(xh, w_ref[l], preferred_element_type=jnp.float32)
                     + b_ref[l])                         # (B, 4H) f32
            ifo = jax.nn.sigmoid(gates[:, :3 * H])       # one sigmoid over (B, 3H)
            g_g = jnp.tanh(gates[:, 3 * H:])
            i_g = ifo[:, :H]
            f_g = ifo[:, H:2 * H]
            o_g = ifo[:, 2 * H:]
            c_new = f_g * c + i_g * g_g
            h_new = o_g * jnp.tanh(c_new)
            hn_ref[l] = h_new
            cn_ref[l] = c_new
            x = h_new
            # Inter-layer LSTM dropout and output Dropout are train-only -> identity in eval.

        x_scr[...] = x.astype(jnp.bfloat16)              # cast once; reused by every tile
        m_scr[...] = jnp.full((B, 1), -jnp.inf, jnp.float32)
        s_scr[...] = jnp.zeros((B, 1), jnp.float32)

    # ---- Every vocab tile: streamed Linear + online-softmax statistics ----
    # TODO(synk): optional 8-bit wlin (fp8 on v7x, int8 on v5e/v6e) with per-tile scales
    # would halve the dominant HBM stream; numerics-changing, so gated off here.
    logits = (jnp.dot(x_scr[...], wlin_ref[...], preferred_element_type=jnp.float32)
              + blin_ref[...])                           # (B, tv) f32
    off = pl.multiple_of(j * tv, tv)
    probs_ref[:, pl.ds(off, tv)] = logits                # raw logits into the resident block

    m_prev = m_scr[...]
    m_new = jnp.maximum(m_prev, jnp.max(logits, axis=-1, keepdims=True))
    s_scr[...] = (s_scr[...] * jnp.exp(m_prev - m_new)
                  + jnp.sum(jnp.exp(logits - m_new), axis=-1, keepdims=True))
    m_scr[...] = m_new

    # ---- Fused finalize on the last tile: normalize the resident (B, V) block ----
    @pl.when(j == n_v - 1)
    def _():
        # exact reciprocal keeps sum(probs) == 1 within ~1e-6 (approx=True would relax that)
        inv_s = pl.reciprocal(s_scr[...], approx=False)
        probs_ref[...] = jnp.exp(probs_ref[...] - m_scr[...]) * inv_s


def _pick_tv(v_size, requested=None):
    """Largest vocab tile <= 2048 that divides V; prefer 256-aligned (v6e/v7x MXU width)."""
    if requested is not None:
        assert v_size % requested == 0, "vocab must be a multiple of the vocab tile size"
        return requested
    for align in (256, 128):
        cands = [t for t in range(align, min(v_size, 2048) + 1, align) if v_size % t == 0]
        if cands:
            return max(cands)
    return v_size                                        # full-width fallback (always legal)


def _vmem_limit_bytes(L, B, H, V, tv):
    """Scoped-VMEM budget from the actual buffer math (+50% headroom).  The Mosaic defaults
    (16 MiB v5e / 32 MiB v6e & v7x) are too small once tv and weight residency grow."""
    f32, bf16 = 4, 2
    db = 2                                               # pipeline double-buffering
    need = db * (2 * L * B * H * f32                     # h0, c0
                 + L * 2 * H * 4 * H * bf16              # fused gate weights
                 + L * 4 * H * f32                       # bias
                 + H * tv * bf16 + tv * f32)             # streamed wlin / blin tiles
    need += db * (B * V * f32 + 2 * L * B * H * f32)     # probs, h_n, c_n outputs
    need += B * H * f32 + B * H * bf16 + 2 * B * f32     # scratch
    return int(max(need * 3 // 2 + (4 << 20), 24 << 20))


def decoder_forward(ids, h0, c0, params, *, tv=None):
    """ids: (B,) int32 ; h0, c0: (L, B, H) f32 ; returns (probs, (h_n, c_n))."""
    emb, w, b, wlin, blin = params
    L, B, H = h0.shape
    V = emb.shape[0]
    tv = _pick_tv(V, tv)
    n_v = V // tv
    ids = ids.astype(jnp.int32)

    grid_spec = pltpu.PrefetchScalarGridSpec(
        num_scalar_prefetch=1,                           # ids -> SMEM, drives the DMA gather
        grid=(n_v,),
        in_specs=[
            pl.BlockSpec(memory_space=pl.ANY),                            # emb stays in HBM
            pl.BlockSpec((L, B, H), lambda j, ids_s: (0, 0, 0)),          # h0
            pl.BlockSpec((L, B, H), lambda j, ids_s: (0, 0, 0)),          # c0
            pl.BlockSpec((L, 2 * H, 4 * H), lambda j, ids_s: (0, 0, 0)),  # fused gate weights
            pl.BlockSpec((L, 1, 4 * H), lambda j, ids_s: (0, 0, 0)),      # gate bias
            pl.BlockSpec((H, tv), lambda j, ids_s: (0, j)),               # wlin streams over V
            pl.BlockSpec((1, tv), lambda j, ids_s: (0, j)),               # blin streams over V
        ],
        out_specs=(
            pl.BlockSpec((B, V), lambda j, ids_s: (0, 0)),                # probs (resident)
            pl.BlockSpec((L, B, H), lambda j, ids_s: (0, 0, 0)),          # h_n (resident)
            pl.BlockSpec((L, B, H), lambda j, ids_s: (0, 0, 0)),          # c_n (resident)
        ),
        scratch_shapes=[
            pltpu.VMEM((B, H), jnp.float32),             # gathered embedding rows
            pltpu.VMEM((B, H), jnp.bfloat16),            # top-layer hidden (cast once)
            pltpu.VMEM((B, 1), jnp.float32),             # running softmax max
            pltpu.VMEM((B, 1), jnp.float32),             # running softmax sum
            pltpu.SemaphoreType.DMA((B,)),               # one DMA sem per gathered row
        ],
    )

    probs, h_n, c_n = pl.pallas_call(
        _decoder_kernel,
        out_shape=(
            jax.ShapeDtypeStruct((B, V), jnp.float32),
            jax.ShapeDtypeStruct((L, B, H), jnp.float32),
            jax.ShapeDtypeStruct((L, B, H), jnp.float32),
        ),
        grid_spec=grid_spec,
        compiler_params=pltpu.CompilerParams(
            # Sequential: online-softmax accumulators, the j==0 one-time LSTM, and the
            # resident probs/h_n/c_n blocks all assume in-order grid execution.
            # TODO(synk): v7x - split the vocab stream across both TensorCores with
            # per-core partial (m, s) and a combine step rather than flipping to "parallel".
            dimension_semantics=("arbitrary",),
            vmem_limit_bytes=_vmem_limit_bytes(L, B, H, V, tv),
        ),
    )(ids, emb, h0, c0, w, b, wlin, blin)

    return probs, (h_n, c_n)


def init_params(key, v_size, hid_dim, num_layers):
    """Deterministic synthetic parameters (PyTorch-like uniform init), kernel layout."""
    k_emb, k_wih, k_whh, k_bih, k_bhh, k_wl, k_bl = jax.random.split(key, 7)
    bound = 1.0 / jnp.sqrt(hid_dim)
    u = lambda k, s: jax.random.uniform(k, s, jnp.float32, -bound, bound)

    emb = jax.random.normal(k_emb, (v_size, hid_dim), jnp.float32)
    # Fused [x ; h] gate weights, gate order (i, f, o, g); pre-transposed so xh @ W -> (B, 4H).
    wih = u(k_wih, (num_layers, hid_dim, 4 * hid_dim))
    whh = u(k_whh, (num_layers, hid_dim, 4 * hid_dim))
    w = jnp.concatenate([wih, whh], axis=1).astype(jnp.bfloat16)          # (L, 2H, 4H)
    b = (u(k_bih, (num_layers, 1, 4 * hid_dim))
         + u(k_bhh, (num_layers, 1, 4 * hid_dim)))
    wlin = u(k_wl, (hid_dim, v_size)).astype(jnp.bfloat16)                # pre-transposed Linear
    blin = u(k_bl, (1, v_size))
    return emb, w, b, wlin, blin


def decoder_reference(ids, h0, c0, params):
    """Pure-JAX reference of the same math (same bf16 weights / f32 accumulation)."""
    emb, w, b, wlin, blin = params
    L, B, H = h0.shape
    V = emb.shape[0]
    x = emb[jnp.clip(ids, 0, V - 1)]                     # (B, H) f32
    hs, cs = [], []
    for l in range(L):
        h, c = h0[l], c0[l]
        xh = jnp.concatenate([x, h], axis=1).astype(jnp.bfloat16)
        gates = jnp.dot(xh, w[l], preferred_element_type=jnp.float32) + b[l]
        i_g = jax.nn.sigmoid(gates[:, :H])
        f_g = jax.nn.sigmoid(gates[:, H:2 * H])
        o_g = jax.nn.sigmoid(gates[:, 2 * H:3 * H])
        g_g = jnp.tanh(gates[:, 3 * H:])
        c_new = f_g * c + i_g * g_g
        h_new = o_g * jnp.tanh(c_new)
        hs.append(h_new)
        cs.append(c_new)
        x = h_new
    logits = jnp.dot(x.astype(jnp.bfloat16), wlin, preferred_element_type=jnp.float32) + blin
    return jax.nn.softmax(logits, axis=1), (jnp.stack(hs), jnp.stack(cs))


if __name__ == "__main__":
    # Small shapes consistent with the module (emb_dim == hid_dim required by forward);
    # H and V are multiples of 128 so all matmul / store dims are lane-dense.
    B, H, V, L = 8, 128, 1024, 2

    key = jax.random.PRNGKey(0)
    k_ids, k_h, k_c, k_p = jax.random.split(key, 4)

    ids = jax.random.randint(k_ids, (B,), 0, V, dtype=jnp.int32)
    h0 = jax.random.normal(k_h, (L, B, H), jnp.float32)
    c0 = jax.random.normal(k_c, (L, B, H), jnp.float32)
    params = init_params(k_p, V, H, L)

    # tv=256 (256-aligned for the v6e/v7x MXU) exercises the multi-tile streamed-Linear +
    # online-softmax path here; the production default picks the largest divisor <= 2048.
    probs, (h_n, c_n) = decoder_forward(ids, h0, c0, params, tv=256)
    jax.block_until_ready((probs, h_n, c_n))

    # Correctness check against the pure-JAX reference.
    ref_probs, (ref_h, ref_c) = decoder_reference(ids, h0, c0, params)
    assert jnp.allclose(probs, ref_probs, atol=1e-4, rtol=1e-4)
    assert jnp.allclose(h_n, ref_h, atol=1e-4, rtol=1e-4)
    assert jnp.allclose(c_n, ref_c, atol=1e-4, rtol=1e-4)
    assert jnp.allclose(jnp.sum(probs, axis=1), 1.0, atol=1e-5)

    print("KERNEL_OK")
</pallas_src>

<mosaic_0001>
module attributes {stable_mosaic.version = 11 : i64} {
  func.func @_decoder_kernel(%arg0: i32, %arg1: memref<8xi32, #tpu.memory_space<smem>>, %arg2: memref<1024x128xf32, #tpu.memory_space<any>>, %arg3: memref<2x8x128xf32, #tpu.memory_space<vmem>>, %arg4: memref<2x8x128xf32, #tpu.memory_space<vmem>>, %arg5: memref<2x256x512xbf16, #tpu.memory_space<vmem>>, %arg6: memref<2x1x512xf32, #tpu.memory_space<vmem>>, %arg7: memref<128x256xbf16, #tpu.memory_space<vmem>>, %arg8: memref<1x256xf32, #tpu.memory_space<vmem>>, %arg9: memref<8x1024xf32, #tpu.memory_space<vmem>>, %arg10: memref<2x8x128xf32, #tpu.memory_space<vmem>>, %arg11: memref<2x8x128xf32, #tpu.memory_space<vmem>>, %arg12: memref<8x128xf32, #tpu.memory_space<vmem>>, %arg13: memref<8x128xbf16, #tpu.memory_space<vmem>>, %arg14: memref<8x1xf32, #tpu.memory_space<vmem>>, %arg15: memref<8x1xf32, #tpu.memory_space<vmem>>, %arg16: memref<8x!tpu.dma_semaphore, #tpu.memory_space<semaphore_mem>>) attributes {dimension_semantics = [#tpu.dimension_semantics<arbitrary>], iteration_bounds = array<i64: 4>, scalar_prefetch = 1 : i64, scratch_operands = 5 : i64, tpu.core_type = #tpu.core_type<tc>, window_params = [{}, {pipeline_mode = #tpu.pipeline_mode<synchronous>, transform_indices = @transform_1, window_bounds = array<i64: 2, 8, 128>}, {pipeline_mode = #tpu.pipeline_mode<synchronous>, transform_indices = @transform_2, window_bounds = array<i64: 2, 8, 128>}, {pipeline_mode = #tpu.pipeline_mode<synchronous>, transform_indices = @transform_3, window_bounds = array<i64: 2, 256, 512>}, {pipeline_mode = #tpu.pipeline_mode<synchronous>, transform_indices = @transform_4, window_bounds = array<i64: 2, 1, 512>}, {transform_indices = @transform_5, window_bounds = array<i64: 128, 256>}, {transform_indices = @transform_6, window_bounds = array<i64: 1, 256>}, {pipeline_mode = #tpu.pipeline_mode<synchronous>, transform_indices = @transform_7, window_bounds = array<i64: 8, 1024>}, {pipeline_mode = #tpu.pipeline_mode<synchronous>, transform_indices = @transform_8, window_bounds = array<i64: 2, 8, 128>}, {pipeline_mode = #tpu.pipeline_mode<synchronous>, transform_indices = @transform_9, window_bounds = array<i64: 2, 8, 128>}]} {
    %c0_i32 = arith.constant 0 : i32
    %0 = arith.cmpi eq, %arg0, %c0_i32 : i32
    %1 = arith.extui %0 : i1 to i32
    %c0_i32_0 = arith.constant 0 : i32
    %2 = arith.cmpi ne, %1, %c0_i32_0 : i32
    scf.if %2 {
      %c0_18 = arith.constant 0 : index
      %32 = memref.load %arg1[%c0_18] : memref<8xi32, #tpu.memory_space<smem>>
      %c0_i32_19 = arith.constant 0 : i32
      %c1023_i32 = arith.constant 1023 : i32
      %33 = arith.maxsi %c0_i32_19, %32 : i32
      %34 = arith.minsi %c1023_i32, %33 : i32
      %c0_i32_20 = arith.constant 0 : i32
      %c0_i32_21 = arith.constant 0 : i32
      %c0_i32_22 = arith.constant 0 : i32
      %35 = tpu.memref_slice %arg2[%34, %c0_i32_22] : memref<1024x128xf32, #tpu.memory_space<any>> -> memref<1x128xf32, #tpu.memory_space<any>>
      %36 = tpu.memref_squeeze %35 : memref<1x128xf32, #tpu.memory_space<any>> -> memref<128xf32, #tpu.memory_space<any>>
      %c0_i32_23 = arith.constant 0 : i32
      %37 = tpu.memref_slice %arg12[%c0_i32_20, %c0_i32_23] : memref<8x128xf32, #tpu.memory_space<vmem>> -> memref<1x128xf32, #tpu.memory_space<vmem>>
      %38 = tpu.memref_squeeze %37 : memref<1x128xf32, #tpu.memory_space<vmem>> -> memref<128xf32, #tpu.memory_space<vmem>>
      %39 = tpu.memref_slice %arg16[%c0_i32_21] : memref<8x!tpu.dma_semaphore, #tpu.memory_space<semaphore_mem>> -> memref<1x!tpu.dma_semaphore, #tpu.memory_space<semaphore_mem>>
      %40 = tpu.memref_squeeze %39 : memref<1x!tpu.dma_semaphore, #tpu.memory_space<semaphore_mem>> -> memref<!tpu.dma_semaphore, #tpu.memory_space<semaphore_mem>>
      tpu.enqueue_dma source(%36 : memref<128xf32, #tpu.memory_space<any>>) target(%38 : memref<128xf32, #tpu.memory_space<vmem>>) target_semaphore(%40 : memref<!tpu.dma_semaphore, #tpu.memory_space<semaphore_mem>>)
      %c1 = arith.constant 1 : index
      %41 = memref.load %arg1[%c1] : memref<8xi32, #tpu.memory_space<smem>>
      %c0_i32_24 = arith.constant 0 : i32
      %c1023_i32_25 = arith.constant 1023 : i32
      %42 = arith.maxsi %c0_i32_24, %41 : i32
      %43 = arith.minsi %c1023_i32_25, %42 : i32
      %c1_i32 = arith.constant 1 : i32
      %c1_i32_26 = arith.constant 1 : i32
      %c0_i32_27 = arith.constant 0 : i32
      %44 = tpu.memref_slice %arg2[%43, %c0_i32_27] : memref<1024x128xf32, #tpu.memory_space<any>> -> memref<1x128xf32, #tpu.memory_space<any>>
      %45 = tpu.memref_squeeze %44 : memref<1x128xf32, #tpu.memory_space<any>> -> memref<128xf32, #tpu.memory_space<any>>
      %c0_i32_28 = arith.constant 0 : i32
      %46 = tpu.memref_slice %arg12[%c1_i32, %c0_i32_28] : memref<8x128xf32, #tpu.memory_space<vmem>> -> memref<1x128xf32, #tpu.memory_space<vmem>>
      %47 = tpu.memref_squeeze %46 : memref<1x128xf32, #tpu.memory_space<vmem>> -> memref<128xf32, #tpu.memory_space<vmem>>
      %48 = tpu.memref_slice %arg16[%c1_i32_26] : memref<8x!tpu.dma_semaphore, #tpu.memory_space<semaphore_mem>> -> memref<1x!tpu.dma_semaphore, #tpu.memory_space<semaphore_mem>>
      %49 = tpu.memref_squeeze %48 : memref<1x!tpu.dma_semaphore, #tpu.memory_space<semaphore_mem>> -> memref<!tpu.dma_semaphore, #tpu.memory_space<semaphore_mem>>
      tpu.enqueue_dma source(%45 : memref<128xf32, #tpu.memory_space<any>>) target(%47 : memref<128xf32, #tpu.memory_space<vmem>>) target_semaphore(%49 : memref<!tpu.dma_semaphore, #tpu.memory_space<semaphore_mem>>)
      %c2 = arith.constant 2 : index
      %50 = memref.load %arg1[%c2] : memref<8xi32, #tpu.memory_space<smem>>
      %c0_i32_29 = arith.constant 0 : i32
      %c1023_i32_30 = arith.constant 1023 : i32
      %51 = arith.maxsi %c0_i32_29, %50 : i32
      %52 = arith.minsi %c1023_i32_30, %51 : i32
      %c2_i32 = arith.constant 2 : i32
      %c2_i32_31 = arith.constant 2 : i32
      %c0_i32_32 = arith.constant 0 : i32
      %53 = tpu.memref_slice %arg2[%52, %c0_i32_32] : memref<1024x128xf32, #tpu.memory_space<any>> -> memref<1x128xf32, #tpu.memory_space<any>>
      %54 = tpu.memref_squeeze %53 : memref<1x128xf32, #tpu.memory_space<any>> -> memref<128xf32, #tpu.memory_space<any>>
      %c0_i32_33 = arith.constant 0 : i32
      %55 = tpu.memref_slice %arg12[%c2_i32, %c0_i32_33] : memref<8x128xf32, #tpu.memory_space<vmem>> -> memref<1x128xf32, #tpu.memory_space<vmem>>
      %56 = tpu.memref_squeeze %55 : memref<1x128xf32, #tpu.memory_space<vmem>> -> memref<128xf32, #tpu.memory_space<vmem>>
      %57 = tpu.memref_slice %arg16[%c2_i32_31] : memref<8x!tpu.dma_semaphore, #tpu.memory_space<semaphore_mem>> -> memref<1x!tpu.dma_semaphore, #tpu.memory_space<semaphore_mem>>
      %58 = tpu.memref_squeeze %57 : memref<1x!tpu.dma_semaphore, #tpu.memory_space<semaphore_mem>> -> memref<!tpu.dma_semaphore, #tpu.memory_space<semaphore_mem>>
      tpu.enqueue_dma source(%54 : memref<128xf32, #tpu.memory_space<any>>) target(%56 : memref<128xf32, #tpu.memory_space<vmem>>) target_semaphore(%58 : memref<!tpu.dma_semaphore, #tpu.memory_space<semaphore_mem>>)
      %c3 = arith.constant 3 : index
      %59 = memref.load %arg1[%c3] : memref<8xi32, #tpu.memory_space<smem>>
      %c0_i32_34 = arith.constant 0 : i32
      %c1023_i32_35 = arith.constant 1023 : i32
      %60 = arith.maxsi %c0_i32_34, %59 : i32
      %61 = arith.minsi %c1023_i32_35, %60 : i32
      %c3_i32_36 = arith.constant 3 : i32
      %c3_i32_37 = arith.constant 3 : i32
      %c0_i32_38 = arith.constant 0 : i32
      %62 = tpu.memref_slice %arg2[%61, %c0_i32_38] : memref<1024x128xf32, #tpu.memory_space<any>> -> memref<1x128xf32, #tpu.memory_space<any>>
      %63 = tpu.memref_squeeze %62 : memref<1x128xf32, #tpu.memory_space<any>> -> memref<128xf32, #tpu.memory_space<any>>
      %c0_i32_39 = arith.constant 0 : i32
      %64 = tpu.memref_slice %arg12[%c3_i32_36, %c0_i32_39] : memref<8x128xf32, #tpu.memory_space<vmem>> -> memref<1x128xf32, #tpu.memory_space<vmem>>
      %65 = tpu.memref_squeeze %64 : memref<1x128xf32, #tpu.memory_space<vmem>> -> memref<128xf32, #tpu.memory_space<vmem>>
      %66 = tpu.memref_slice %arg16[%c3_i32_37] : memref<8x!tpu.dma_semaphore, #tpu.memory_space<semaphore_mem>> -> memref<1x!tpu.dma_semaphore, #tpu.memory_space<semaphore_mem>>
      %67 = tpu.memref_squeeze %66 : memref<1x!tpu.dma_semaphore, #tpu.memory_space<semaphore_mem>> -> memref<!tpu.dma_semaphore, #tpu.memory_space<semaphore_mem>>
      tpu.enqueue_dma source(%63 : memref<128xf32, #tpu.memory_space<any>>) target(%65 : memref<128xf32, #tpu.memory_space<vmem>>) target_semaphore(%67 : memref<!tpu.dma_semaphore, #tpu.memory_space<semaphore_mem>>)
      %c4 = arith.constant 4 : index
      %68 = memref.load %arg1[%c4] : memref<8xi32, #tpu.memory_space<smem>>
      %c0_i32_40 = arith.constant 0 : i32
      %c1023_i32_41 = arith.constant 1023 : i32
      %69 = arith.maxsi %c0_i32_40, %68 : i32
      %70 = arith.minsi %c1023_i32_41, %69 : i32
      %c4_i32 = arith.constant 4 : i32
      %c4_i32_42 = arith.constant 4 : i32
      %c0_i32_43 = arith.constant 0 : i32
      %71 = tpu.memref_slice %arg2[%70, %c0_i32_43] : memref<1024x128xf32, #tpu.memory_space<any>> -> memref<1x128xf32, #tpu.memory_space<any>>
      %72 = tpu.memref_squeeze %71 : memref<1x128xf32, #tpu.memory_space<any>> -> memref<128xf32, #tpu.memory_space<any>>
      %c0_i32_44 = arith.constant 0 : i32
      %73 = tpu.memref_slice %arg12[%c4_i32, %c0_i32_44] : memref<8x128xf32, #tpu.memory_space<vmem>> -> memref<1x128xf32, #tpu.memory_space<vmem>>
      %74 = tpu.memref_squeeze %73 : memref<1x128xf32, #tpu.memory_space<vmem>> -> memref<128xf32, #tpu.memory_space<vmem>>
      %75 = tpu.memref_slice %arg16[%c4_i32_42] : memref<8x!tpu.dma_semaphore, #tpu.memory_space<semaphore_mem>> -> memref<1x!tpu.dma_semaphore, #tpu.memory_space<semaphore_mem>>
      %76 = tpu.memref_squeeze %75 : memref<1x!tpu.dma_semaphore, #tpu.memory_space<semaphore_mem>> -> memref<!tpu.dma_semaphore, #tpu.memory_space<semaphore_mem>>
      tpu.enqueue_dma source(%72 : memref<128xf32, #tpu.memory_space<any>>) target(%74 : memref<128xf32, #tpu.memory_space<vmem>>) target_semaphore(%76 : memref<!tpu.dma_semaphore, #tpu.memory_space<semaphore_mem>>)
      %c5 = arith.constant 5 : index
      %77 = memref.load %arg1[%c5] : memref<8xi32, #tpu.memory_space<smem>>
      %c0_i32_45 = arith.constant 0 : i32
      %c1023_i32_46 = arith.constant 1023 : i32
      %78 = arith.maxsi %c0_i32_45, %77 : i32
      %79 = arith.minsi %c1023_i32_46, %78 : i32
      %c5_i32 = arith.constant 5 : i32
      %c5_i32_47 = arith.constant 5 : i32
      %c0_i32_48 = arith.constant 0 : i32
      %80 = tpu.memref_slice %arg2[%79, %c0_i32_48] : memref<1024x128xf32, #tpu.memory_space<any>> -> memref<1x128xf32, #tpu.memory_space<any>>
      %81 = tpu.memref_squeeze %80 : memref<1x128xf32, #tpu.memory_space<any>> -> memref<128xf32, #tpu.memory_space<any>>
      %c0_i32_49 = arith.constant 0 : i32
      %82 = tpu.memref_slice %arg12[%c5_i32, %c0_i32_49] : memref<8x128xf32, #tpu.memory_space<vmem>> -> memref<1x128xf32, #tpu.memory_space<vmem>>
      %83 = tpu.memref_squeeze %82 : memref<1x128xf32, #tpu.memory_space<vmem>> -> memref<128xf32, #tpu.memory_space<vmem>>
      %84 = tpu.memref_slice %arg16[%c5_i32_47] : memref<8x!tpu.dma_semaphore, #tpu.memory_space<semaphore_mem>> -> memref<1x!tpu.dma_semaphore, #tpu.memory_space<semaphore_mem>>
      %85 = tpu.memref_squeeze %84 : memref<1x!tpu.dma_semaphore, #tpu.memory_space<semaphore_mem>> -> memref<!tpu.dma_semaphore, #tpu.memory_space<semaphore_mem>>
      tpu.enqueue_dma source(%81 : memref<128xf32, #tpu.memory_space<any>>) target(%83 : memref<128xf32, #tpu.memory_space<vmem>>) target_semaphore(%85 : memref<!tpu.dma_semaphore, #tpu.memory_space<semaphore_mem>>)
      %c6 = arith.constant 6 : index
      %86 = memref.load %arg1[%c6] : memref<8xi32, #tpu.memory_space<smem>>
      %c0_i32_50 = arith.constant 0 : i32
      %c1023_i32_51 = arith.constant 1023 : i32
      %87 = arith.maxsi %c0_i32_50, %86 : i32
      %88 = arith.minsi %c1023_i32_51, %87 : i32
      %c6_i32 = arith.constant 6 : i32
      %c6_i32_52 = arith.constant 6 : i32
      %c0_i32_53 = arith.constant 0 : i32
      %89 = tpu.memref_slice %arg2[%88, %c0_i32_53] : memref<1024x128xf32, #tpu.memory_space<any>> -> memref<1x128xf32, #tpu.memory_space<any>>
      %90 = tpu.memref_squeeze %89 : memref<1x128xf32, #tpu.memory_space<any>> -> memref<128xf32, #tpu.memory_space<any>>
      %c0_i32_54 = arith.constant 0 : i32
      %91 = tpu.memref_slice %arg12[%c6_i32, %c0_i32_54] : memref<8x128xf32, #tpu.memory_space<vmem>> -> memref<1x128xf32, #tpu.memory_space<vmem>>
      %92 = tpu.memref_squeeze %91 : memref<1x128xf32, #tpu.memory_space<vmem>> -> memref<128xf32, #tpu.memory_space<vmem>>
      %93 = tpu.memref_slice %arg16[%c6_i32_52] : memref<8x!tpu.dma_semaphore, #tpu.memory_space<semaphore_mem>> -> memref<1x!tpu.dma_semaphore, #tpu.memory_space<semaphore_mem>>
      %94 = tpu.memref_squeeze %93 : memref<1x!tpu.dma_semaphore, #tpu.memory_space<semaphore_mem>> -> memref<!tpu.dma_semaphore, #tpu.memory_space<semaphore_mem>>
      tpu.enqueue_dma source(%90 : memref<128xf32, #tpu.memory_space<any>>) target(%92 : memref<128xf32, #tpu.memory_space<vmem>>) target_semaphore(%94 : memref<!tpu.dma_semaphore, #tpu.memory_space<semaphore_mem>>)
      %c7 = arith.constant 7 : index
      %95 = memref.load %arg1[%c7] : memref<8xi32, #tpu.memory_space<smem>>
      %c0_i32_55 = arith.constant 0 : i32
      %c1023_i32_56 = arith.constant 1023 : i32
      %96 = arith.maxsi %c0_i32_55, %95 : i32
      %97 = arith.minsi %c1023_i32_56, %96 : i32
      %c7_i32 = arith.constant 7 : i32
      %c7_i32_57 = arith.constant 7 : i32
      %c0_i32_58 = arith.constant 0 : i32
      %98 = tpu.memref_slice %arg2[%97, %c0_i32_58] : memref<1024x128xf32, #tpu.memory_space<any>> -> memref<1x128xf32, #tpu.memory_space<any>>
      %99 = tpu.memref_squeeze %98 : memref<1x128xf32, #tpu.memory_space<any>> -> memref<128xf32, #tpu.memory_space<any>>
      %c0_i32_59 = arith.constant 0 : i32
      %100 = tpu.memref_slice %arg12[%c7_i32, %c0_i32_59] : memref<8x128xf32, #tpu.memory_space<vmem>> -> memref<1x128xf32, #tpu.memory_space<vmem>>
      %101 = tpu.memref_squeeze %100 : memref<1x128xf32, #tpu.memory_space<vmem>> -> memref<128xf32, #tpu.memory_space<vmem>>
      %102 = tpu.memref_slice %arg16[%c7_i32_57] : memref<8x!tpu.dma_semaphore, #tpu.memory_space<semaphore_mem>> -> memref<1x!tpu.dma_semaphore, #tpu.memory_space<semaphore_mem>>
      %103 = tpu.memref_squeeze %102 : memref<1x!tpu.dma_semaphore, #tpu.memory_space<semaphore_mem>> -> memref<!tpu.dma_semaphore, #tpu.memory_space<semaphore_mem>>
      tpu.enqueue_dma source(%99 : memref<128xf32, #tpu.memory_space<any>>) target(%101 : memref<128xf32, #tpu.memory_space<vmem>>) target_semaphore(%103 : memref<!tpu.dma_semaphore, #tpu.memory_space<semaphore_mem>>)
      %c0_i32_60 = arith.constant 0 : i32
      %c0_i32_61 = arith.constant 0 : i32
      %c0_i32_62 = arith.constant 0 : i32
      %104 = tpu.memref_slice %arg2[%34, %c0_i32_62] : memref<1024x128xf32, #tpu.memory_space<any>> -> memref<1x128xf32, #tpu.memory_space<any>>
      %105 = tpu.memref_squeeze %104 : memref<1x128xf32, #tpu.memory_space<any>> -> memref<128xf32, #tpu.memory_space<any>>
      %c0_i32_63 = arith.constant 0 : i32
      %106 = tpu.memref_slice %arg12[%c0_i32_60, %c0_i32_63] : memref<8x128xf32, #tpu.memory_space<vmem>> -> memref<1x128xf32, #tpu.memory_space<vmem>>
      %107 = tpu.memref_squeeze %106 : memref<1x128xf32, #tpu.memory_space<vmem>> -> memref<128xf32, #tpu.memory_space<vmem>>
      %108 = tpu.memref_slice %arg16[%c0_i32_61] : memref<8x!tpu.dma_semaphore, #tpu.memory_space<semaphore_mem>> -> memref<1x!tpu.dma_semaphore, #tpu.memory_space<semaphore_mem>>
      %109 = tpu.memref_squeeze %108 : memref<1x!tpu.dma_semaphore, #tpu.memory_space<semaphore_mem>> -> memref<!tpu.dma_semaphore, #tpu.memory_space<semaphore_mem>>
      tpu.wait_dma2 semaphore(%109 : memref<!tpu.dma_semaphore, #tpu.memory_space<semaphore_mem>>) src(%105 : memref<128xf32, #tpu.memory_space<any>>) dst(%107 : memref<128xf32, #tpu.memory_space<vmem>>)
      %c1_i32_64 = arith.constant 1 : i32
      %c1_i32_65 = arith.constant 1 : i32
      %c0_i32_66 = arith.constant 0 : i32
      %110 = tpu.memref_slice %arg2[%43, %c0_i32_66] : memref<1024x128xf32, #tpu.memory_space<any>> -> memref<1x128xf32, #tpu.memory_space<any>>
      %111 = tpu.memref_squeeze %110 : memref<1x128xf32, #tpu.memory_space<any>> -> memref<128xf32, #tpu.memory_space<any>>
      %c0_i32_67 = arith.constant 0 : i32
      %112 = tpu.memref_slice %arg12[%c1_i32_64, %c0_i32_67] : memref<8x128xf32, #tpu.memory_space<vmem>> -> memref<1x128xf32, #tpu.memory_space<vmem>>
      %113 = tpu.memref_squeeze %112 : memref<1x128xf32, #tpu.memory_space<vmem>> -> memref<128xf32, #tpu.memory_space<vmem>>
      %114 = tpu.memref_slice %arg16[%c1_i32_65] : memref<8x!tpu.dma_semaphore, #tpu.memory_space<semaphore_mem>> -> memref<1x!tpu.dma_semaphore, #tpu.memory_space<semaphore_mem>>
      %115 = tpu.memref_squeeze %114 : memref<1x!tpu.dma_semaphore, #tpu.memory_space<semaphore_mem>> -> memref<!tpu.dma_semaphore, #tpu.memory_space<semaphore_mem>>
      tpu.wait_dma2 semaphore(%115 : memref<!tpu.dma_semaphore, #tpu.memory_space<semaphore_mem>>) src(%111 : memref<128xf32, #tpu.memory_space<any>>) dst(%113 : memref<128xf32, #tpu.memory_space<vmem>>)
      %c2_i32_68 = arith.constant 2 : i32
      %c2_i32_69 = arith.constant 2 : i32
      %c0_i32_70 = arith.constant 0 : i32
      %116 = tpu.memref_slice %arg2[%52, %c0_i32_70] : memref<1024x128xf32, #tpu.memory_space<any>> -> memref<1x128xf32, #tpu.memory_space<any>>
      %117 = tpu.memref_squeeze %116 : memref<1x128xf32, #tpu.memory_space<any>> -> memref<128xf32, #tpu.memory_space<any>>
      %c0_i32_71 = arith.constant 0 : i32
      %118 = tpu.memref_slice %arg12[%c2_i32_68, %c0_i32_71] : memref<8x128xf32, #tpu.memory_space<vmem>> -> memref<1x128xf32, #tpu.memory_space<vmem>>
      %119 = tpu.memref_squeeze %118 : memref<1x128xf32, #tpu.memory_space<vmem>> -> memref<128xf32, #tpu.memory_space<vmem>>
      %120 = tpu.memref_slice %arg16[%c2_i32_69] : memref<8x!tpu.dma_semaphore, #tpu.memory_space<semaphore_mem>> -> memref<1x!tpu.dma_semaphore, #tpu.memory_space<semaphore_mem>>
      %121 = tpu.memref_squeeze %120 : memref<1x!tpu.dma_semaphore, #tpu.memory_space<semaphore_mem>> -> memref<!tpu.dma_semaphore, #tpu.memory_space<semaphore_mem>>
      tpu.wait_dma2 semaphore(%121 : memref<!tpu.dma_semaphore, #tpu.memory_space<semaphore_mem>>) src(%117 : memref<128xf32, #tpu.memory_space<any>>) dst(%119 : memref<128xf32, #tpu.memory_space<vmem>>)
      %c3_i32_72 = arith.constant 3 : i32
      %c3_i32_73 = arith.constant 3 : i32
      %c0_i32_74 = arith.constant 0 : i32
      %122 = tpu.memref_slice %arg2[%61, %c0_i32_74] : memref<1024x128xf32, #tpu.memory_space<any>> -> memref<1x128xf32, #tpu.memory_space<any>>
      %123 = tpu.memref_squeeze %122 : memref<1x128xf32, #tpu.memory_space<any>> -> memref<128xf32, #tpu.memory_space<any>>
      %c0_i32_75 = arith.constant 0 : i32
      %124 = tpu.memref_slice %arg12[%c3_i32_72, %c0_i32_75] : memref<8x128xf32, #tpu.memory_space<vmem>> -> memref<1x128xf32, #tpu.memory_space<vmem>>
      %125 = tpu.memref_squeeze %124 : memref<1x128xf32, #tpu.memory_space<vmem>> -> memref<128xf32, #tpu.memory_space<vmem>>
      %126 = tpu.memref_slice %arg16[%c3_i32_73] : memref<8x!tpu.dma_semaphore, #tpu.memory_space<semaphore_mem>> -> memref<1x!tpu.dma_semaphore, #tpu.memory_space<semaphore_mem>>
      %127 = tpu.memref_squeeze %126 : memref<1x!tpu.dma_semaphore, #tpu.memory_space<semaphore_mem>> -> memref<!tpu.dma_semaphore, #tpu.memory_space<semaphore_mem>>
      tpu.wait_dma2 semaphore(%127 : memref<!tpu.dma_semaphore, #tpu.memory_space<semaphore_mem>>) src(%123 : memref<128xf32, #tpu.memory_space<any>>) dst(%125 : memref<128xf32, #tpu.memory_space<vmem>>)
      %c4_i32_76 = arith.constant 4 : i32
      %c4_i32_77 = arith.constant 4 : i32
      %c0_i32_78 = arith.constant 0 : i32
      %128 = tpu.memref_slice %arg2[%70, %c0_i32_78] : memref<1024x128xf32, #tpu.memory_space<any>> -> memref<1x128xf32, #tpu.memory_space<any>>
      %129 = tpu.memref_squeeze %128 : memref<1x128xf32, #tpu.memory_space<any>> -> memref<128xf32, #tpu.memory_space<any>>
      %c0_i32_79 = arith.constant 0 : i32
      %130 = tpu.memref_slice %arg12[%c4_i32_76, %c0_i32_79] : memref<8x128xf32, #tpu.memory_space<vmem>> -> memref<1x128xf32, #tpu.memory_space<vmem>>
      %131 = tpu.memref_squeeze %130 : memref<1x128xf32, #tpu.memory_space<vmem>> -> memref<128xf32, #tpu.memory_space<vmem>>
      %132 = tpu.memref_slice %arg16[%c4_i32_77] : memref<8x!tpu.dma_semaphore, #tpu.memory_space<semaphore_mem>> -> memref<1x!tpu.dma_semaphore, #tpu.memory_space<semaphore_mem>>
      %133 = tpu.memref_squeeze %132 : memref<1x!tpu.dma_semaphore, #tpu.memory_space<semaphore_mem>> -> memref<!tpu.dma_semaphore, #tpu.memory_space<semaphore_mem>>
      tpu.wait_dma2 semaphore(%133 : memref<!tpu.dma_semaphore, #tpu.memory_space<semaphore_mem>>) src(%129 : memref<128xf32, #tpu.memory_space<any>>) dst(%131 : memref<128xf32, #tpu.memory_space<vmem>>)
      %c5_i32_80 = arith.constant 5 : i32
      %c5_i32_81 = arith.constant 5 : i32
      %c0_i32_82 = arith.constant 0 : i32
      %134 = tpu.memref_slice %arg2[%79, %c0_i32_82] : memref<1024x128xf32, #tpu.memory_space<any>> -> memref<1x128xf32, #tpu.memory_space<any>>
      %135 = tpu.memref_squeeze %134 : memref<1x128xf32, #tpu.memory_space<any>> -> memref<128xf32, #tpu.memory_space<any>>
      %c0_i32_83 = arith.constant 0 : i32
      %136 = tpu.memref_slice %arg12[%c5_i32_80, %c0_i32_83] : memref<8x128xf32, #tpu.memory_space<vmem>> -> memref<1x128xf32, #tpu.memory_space<vmem>>
      %137 = tpu.memref_squeeze %136 : memref<1x128xf32, #tpu.memory_space<vmem>> -> memref<128xf32, #tpu.memory_space<vmem>>
      %138 = tpu.memref_slice %arg16[%c5_i32_81] : memref<8x!tpu.dma_semaphore, #tpu.memory_space<semaphore_mem>> -> memref<1x!tpu.dma_semaphore, #tpu.memory_space<semaphore_mem>>
      %139 = tpu.memref_squeeze %138 : memref<1x!tpu.dma_semaphore, #tpu.memory_space<semaphore_mem>> -> memref<!tpu.dma_semaphore, #tpu.memory_space<semaphore_mem>>
      tpu.wait_dma2 semaphore(%139 : memref<!tpu.dma_semaphore, #tpu.memory_space<semaphore_mem>>) src(%135 : memref<128xf32, #tpu.memory_space<any>>) dst(%137 : memref<128xf32, #tpu.memory_space<vmem>>)
      %c6_i32_84 = arith.constant 6 : i32
      %c6_i32_85 = arith.constant 6 : i32
      %c0_i32_86 = arith.constant 0 : i32
      %140 = tpu.memref_slice %arg2[%88, %c0_i32_86] : memref<1024x128xf32, #tpu.memory_space<any>> -> memref<1x128xf32, #tpu.memory_space<any>>
      %141 = tpu.memref_squeeze %140 : memref<1x128xf32, #tpu.memory_space<any>> -> memref<128xf32, #tpu.memory_space<any>>
      %c0_i32_87 = arith.constant 0 : i32
      %142 = tpu.memref_slice %arg12[%c6_i32_84, %c0_i32_87] : memref<8x128xf32, #tpu.memory_space<vmem>> -> memref<1x128xf32, #tpu.memory_space<vmem>>
      %143 = tpu.memref_squeeze %142 : memref<1x128xf32, #tpu.memory_space<vmem>> -> memref<128xf32, #tpu.memory_space<vmem>>
      %144 = tpu.memref_slice %arg16[%c6_i32_85] : memref<8x!tpu.dma_semaphore, #tpu.memory_space<semaphore_mem>> -> memref<1x!tpu.dma_semaphore, #tpu.memory_space<semaphore_mem>>
      %145 = tpu.memref_squeeze %144 : memref<1x!tpu.dma_semaphore, #tpu.memory_space<semaphore_mem>> -> memref<!tpu.dma_semaphore, #tpu.memory_space<semaphore_mem>>
      tpu.wait_dma2 semaphore(%145 : memref<!tpu.dma_semaphore, #tpu.memory_space<semaphore_mem>>) src(%141 : memref<128xf32, #tpu.memory_space<any>>) dst(%143 : memref<128xf32, #tpu.memory_space<vmem>>)
      %c7_i32_88 = arith.constant 7 : i32
      %c7_i32_89 = arith.constant 7 : i32
      %c0_i32_90 = arith.constant 0 : i32
      %146 = tpu.memref_slice %arg2[%97, %c0_i32_90] : memref<1024x128xf32, #tpu.memory_space<any>> -> memref<1x128xf32, #tpu.memory_space<any>>
      %147 = tpu.memref_squeeze %146 : memref<1x128xf32, #tpu.memory_space<any>> -> memref<128xf32, #tpu.memory_space<any>>
      %c0_i32_91 = arith.constant 0 : i32
      %148 = tpu.memref_slice %arg12[%c7_i32_88, %c0_i32_91] : memref<8x128xf32, #tpu.memory_space<vmem>> -> memref<1x128xf32, #tpu.memory_space<vmem>>
      %149 = tpu.memref_squeeze %148 : memref<1x128xf32, #tpu.memory_space<vmem>> -> memref<128xf32, #tpu.memory_space<vmem>>
      %150 = tpu.memref_slice %arg16[%c7_i32_89] : memref<8x!tpu.dma_semaphore, #tpu.memory_space<semaphore_mem>> -> memref<1x!tpu.dma_semaphore, #tpu.memory_space<semaphore_mem>>
      %151 = tpu.memref_squeeze %150 : memref<1x!tpu.dma_semaphore, #tpu.memory_space<semaphore_mem>> -> memref<!tpu.dma_semaphore, #tpu.memory_space<semaphore_mem>>
      tpu.wait_dma2 semaphore(%151 : memref<!tpu.dma_semaphore, #tpu.memory_space<semaphore_mem>>) src(%147 : memref<128xf32, #tpu.memory_space<any>>) dst(%149 : memref<128xf32, #tpu.memory_space<vmem>>)
      %c0_92 = arith.constant 0 : index
      %c0_93 = arith.constant 0 : index
      %152 = vector.load %arg12[%c0_92, %c0_93] : memref<8x128xf32, #tpu.memory_space<vmem>>, vector<8x128xf32>
      %c0_94 = arith.constant 0 : index
      %c0_95 = arith.constant 0 : index
      %c0_96 = arith.constant 0 : index
      %153 = vector.load %arg3[%c0_94, %c0_95, %c0_96] : memref<2x8x128xf32, #tpu.memory_space<vmem>>, vector<1x8x128xf32>
      %154 = vector.shape_cast %153 : vector<1x8x128xf32> to vector<8x128xf32>
      %c0_97 = arith.constant 0 : index
      %c0_98 = arith.constant 0 : index
      %c0_99 = arith.constant 0 : index
      %155 = vector.load %arg4[%c0_97, %c0_98, %c0_99] : memref<2x8x128xf32, #tpu.memory_space<vmem>>, vector<1x8x128xf32>
      %156 = vector.shape_cast %155 : vector<1x8x128xf32> to vector<8x128xf32>
      %157 = tpu.concatenate %152, %154 in 1 : vector<8x128xf32>, vector<8x128xf32> -> vector<8x256xf32>
      %158 = arith.truncf %157 : vector<8x256xf32> to vector<8x256xbf16>
      %c0_100 = arith.constant 0 : index
      %c0_101 = arith.constant 0 : index
      %c0_102 = arith.constant 0 : index
      %159 = vector.load %arg5[%c0_100, %c0_101, %c0_102] : memref<2x256x512xbf16, #tpu.memory_space<vmem>>, vector<1x256x512xbf16>
      %160 = vector.shape_cast %159 : vector<1x256x512xbf16> to vector<256x512xbf16>
      %cst_103 = arith.constant dense<0.000000e+00> : vector<8x512xf32>
      %161 = tpu.matmul %158, %160, %cst_103 {dimension_numbers = #tpu.dot_dimension_numbers<[1], [0], [0], [1], [0, 0, 1, 1], [], []>} : vector<8x256xbf16>, vector<256x512xbf16>, vector<8x512xf32> -> vector<8x512xf32>
      %c0_104 = arith.constant 0 : index
      %c0_105 = arith.constant 0 : index
      %c0_106 = arith.constant 0 : index
      %162 = vector.load %arg6[%c0_104, %c0_105, %c0_106] : memref<2x1x512xf32, #tpu.memory_space<vmem>>, vector<1x1x512xf32>
      %163 = vector.shape_cast %162 : vector<1x1x512xf32> to vector<1x512xf32>
      %164 = vector.broadcast %163 : vector<1x512xf32> to vector<8x512xf32>
      %165 = arith.addf %161, %164 : vector<8x512xf32>
      %166 = vector.extract_strided_slice %165 {offsets = [0, 0], sizes = [8, 384], strides = [1, 1]} : vector<8x512xf32> to vector<8x384xf32>
      %167 = arith.negf %166 : vector<8x384xf32>
      %168 = math.exp %167 : vector<8x384xf32>
      %cst_107 = arith.constant 1.000000e+00 : f32
      %169 = vector.broadcast %cst_107 : f32 to vector<8x384xf32>
      %170 = arith.addf %169, %168 : vector<8x384xf32>
      %171 = arith.divf %169, %170 : vector<8x384xf32>
      %172 = vector.extract_strided_slice %165 {offsets = [0, 384], sizes = [8, 128], strides = [1, 1]} : vector<8x512xf32> to vector<8x128xf32>
      %173 = math.tanh %172 : vector<8x128xf32>
      %174 = vector.extract_strided_slice %171 {offsets = [0, 0], sizes = [8, 128], strides = [1, 1]} : vector<8x384xf32> to vector<8x128xf32>
      %175 = vector.extract_strided_slice %171 {offsets = [0, 128], sizes = [8, 128], strides = [1, 1]} : vector<8x384xf32> to vector<8x128xf32>
      %176 = vector.extract_strided_slice %171 {offsets = [0, 256], sizes = [8, 128], strides = [1, 1]} : vector<8x384xf32> to vector<8x128xf32>
      %177 = arith.mulf %175, %156 : vector<8x128xf32>
      %178 = arith.mulf %174, %173 : vector<8x128xf32>
      %179 = arith.addf %177, %178 : vector<8x128xf32>
      %180 = math.tanh %179 : vector<8x128xf32>
      %181 = arith.mulf %176, %180 : vector<8x128xf32>
      %c0_108 = arith.constant 0 : index
      %c0_109 = arith.constant 0 : index
      %c0_110 = arith.constant 0 : index
      %182 = vector.load %arg10[%c0_108, %c0_109, %c0_110] : memref<2x8x128xf32, #tpu.memory_space<vmem>>, vector<1x8x128xf32>
      %183 = vector.shape_cast %182 : vector<1x8x128xf32> to vector<8x128xf32>
      %184 = vector.shape_cast %181 : vector<8x128xf32> to vector<1x8x128xf32>
      tpu.vector_store %arg10[%c0_108, %c0_109, %c0_110], %184 {strides = array<i32>} : memref<2x8x128xf32, #tpu.memory_space<vmem>>, vector<1x8x128xf32>,
      %c0_111 = arith.constant 0 : index
      %c0_112 = arith.constant 0 : index
      %c0_113 = arith.constant 0 : index
      %185 = vector.load %arg11[%c0_111, %c0_112, %c0_113] : memref<2x8x128xf32, #tpu.memory_space<vmem>>, vector<1x8x128xf32>
      %186 = vector.shape_cast %185 : vector<1x8x128xf32> to vector<8x128xf32>
      %187 = vector.shape_cast %179 : vector<8x128xf32> to vector<1x8x128xf32>
      tpu.vector_store %arg11[%c0_111, %c0_112, %c0_113], %187 {strides = array<i32>} : memref<2x8x128xf32, #tpu.memory_space<vmem>>, vector<1x8x128xf32>,
      %c1_114 = arith.constant 1 : index
      %c0_115 = arith.constant 0 : index
      %c0_116 = arith.constant 0 : index
      %188 = vector.load %arg3[%c1_114, %c0_115, %c0_116] : memref<2x8x128xf32, #tpu.memory_space<vmem>>, vector<1x8x128xf32>
      %189 = vector.shape_cast %188 : vector<1x8x128xf32> to vector<8x128xf32>
      %c1_117 = arith.constant 1 : index
      %c0_118 = arith.constant 0 : index
      %c0_119 = arith.constant 0 : index
      %190 = vector.load %arg4[%c1_117, %c0_118, %c0_119] : memref<2x8x128xf32, #tpu.memory_space<vmem>>, vector<1x8x128xf32>
      %191 = vector.shape_cast %190 : vector<1x8x128xf32> to vector<8x128xf32>
      %192 = tpu.concatenate %181, %189 in 1 : vector<8x128xf32>, vector<8x128xf32> -> vector<8x256xf32>
      %193 = arith.truncf %192 : vector<8x256xf32> to vector<8x256xbf16>
      %c1_120 = arith.constant 1 : index
      %c0_121 = arith.constant 0 : index
      %c0_122 = arith.constant 0 : index
      %194 = vector.load %arg5[%c1_120, %c0_121, %c0_122] : memref<2x256x512xbf16, #tpu.memory_space<vmem>>, vector<1x256x512xbf16>
      %195 = vector.shape_cast %194 : vector<1x256x512xbf16> to vector<256x512xbf16>
      %cst_123 = arith.constant dense<0.000000e+00> : vector<8x512xf32>
      %196 = tpu.matmul %193, %195, %cst_123 {dimension_numbers = #tpu.dot_dimension_numbers<[1], [0], [0], [1], [0, 0, 1, 1], [], []>} : vector<8x256xbf16>, vector<256x512xbf16>, vector<8x512xf32> -> vector<8x512xf32>
      %c1_124 = arith.constant 1 : index
      %c0_125 = arith.constant 0 : index
      %c0_126 = arith.constant 0 : index
      %197 = vector.load %arg6[%c1_124, %c0_125, %c0_126] : memref<2x1x512xf32, #tpu.memory_space<vmem>>, vector<1x1x512xf32>
      %198 = vector.shape_cast %197 : vector<1x1x512xf32> to vector<1x512xf32>
      %199 = vector.broadcast %198 : vector<1x512xf32> to vector<8x512xf32>
      %200 = arith.addf %196, %199 : vector<8x512xf32>
      %201 = vector.extract_strided_slice %200 {offsets = [0, 0], sizes = [8, 384], strides = [1, 1]} : vector<8x512xf32> to vector<8x384xf32>
      %202 = arith.negf %201 : vector<8x384xf32>
      %203 = math.exp %202 : vector<8x384xf32>
      %cst_127 = arith.constant 1.000000e+00 : f32
      %204 = vector.broadcast %cst_127 : f32 to vector<8x384xf32>
      %205 = arith.addf %204, %203 : vector<8x384xf32>
      %206 = arith.divf %204, %205 : vector<8x384xf32>
      %207 = vector.extract_strided_slice %200 {offsets = [0, 384], sizes = [8, 128], strides = [1, 1]} : vector<8x512xf32> to vector<8x128xf32>
      %208 = math.tanh %207 : vector<8x128xf32>
      %209 = vector.extract_strided_slice %206 {offsets = [0, 0], sizes = [8, 128], strides = [1, 1]} : vector<8x384xf32> to vector<8x128xf32>
      %210 = vector.extract_strided_slice %206 {offsets = [0, 128], sizes = [8, 128], strides = [1, 1]} : vector<8x384xf32> to vector<8x128xf32>
      %211 = vector.extract_strided_slice %206 {offsets = [0, 256], sizes = [8, 128], strides = [1, 1]} : vector<8x384xf32> to vector<8x128xf32>
      %212 = arith.mulf %210, %191 : vector<8x128xf32>
      %213 = arith.mulf %209, %208 : vector<8x128xf32>
      %214 = arith.addf %212, %213 : vector<8x128xf32>
      %215 = math.tanh %214 : vector<8x128xf32>
      %216 = arith.mulf %211, %215 : vector<8x128xf32>
      %c1_128 = arith.constant 1 : index
      %c0_129 = arith.constant 0 : index
      %c0_130 = arith.constant 0 : index
      %217 = vector.load %arg10[%c1_128, %c0_129, %c0_130] : memref<2x8x128xf32, #tpu.memory_space<vmem>>, vector<1x8x128xf32>
      %218 = vector.shape_cast %217 : vector<1x8x128xf32> to vector<8x128xf32>
      %219 = vector.shape_cast %216 : vector<8x128xf32> to vector<1x8x128xf32>
      tpu.vector_store %arg10[%c1_128, %c0_129, %c0_130], %219 {strides = array<i32>} : memref<2x8x128xf32, #tpu.memory_space<vmem>>, vector<1x8x128xf32>,
      %c1_131 = arith.constant 1 : index
      %c0_132 = arith.constant 0 : index
      %c0_133 = arith.constant 0 : index
      %220 = vector.load %arg11[%c1_131, %c0_132, %c0_133] : memref<2x8x128xf32, #tpu.memory_space<vmem>>, vector<1x8x128xf32>
      %221 = vector.shape_cast %220 : vector<1x8x128xf32> to vector<8x128xf32>
      %222 = vector.shape_cast %214 : vector<8x128xf32> to vector<1x8x128xf32>
      tpu.vector_store %arg11[%c1_131, %c0_132, %c0_133], %222 {strides = array<i32>} : memref<2x8x128xf32, #tpu.memory_space<vmem>>, vector<1x8x128xf32>,
      %223 = arith.truncf %216 : vector<8x128xf32> to vector<8x128xbf16>
      %c0_134 = arith.constant 0 : index
      %c0_135 = arith.constant 0 : index
      %224 = vector.load %arg13[%c0_134, %c0_135] : memref<8x128xbf16, #tpu.memory_space<vmem>>, vector<8x128xbf16>
      tpu.vector_store %arg13[%c0_134, %c0_135], %223 {strides = array<i32>} : memref<8x128xbf16, #tpu.memory_space<vmem>>, vector<8x128xbf16>,
      %cst_136 = arith.constant 0xFF800000 : f32
      %225 = vector.broadcast %cst_136 : f32 to vector<8x1xf32>
      %c0_137 = arith.constant 0 : index
      %c0_138 = arith.constant 0 : index
      %226 = vector.load %arg14[%c0_137, %c0_138] : memref<8x1xf32, #tpu.memory_space<vmem>>, vector<8x1xf32>
      tpu.vector_store %arg14[%c0_137, %c0_138], %225 {strides = array<i32>} : memref<8x1xf32, #tpu.memory_space<vmem>>, vector<8x1xf32>,
      %cst_139 = arith.constant 0.000000e+00 : f32
      %227 = vector.broadcast %cst_139 : f32 to vector<8x1xf32>
      %c0_140 = arith.constant 0 : index
      %c0_141 = arith.constant 0 : index
      %228 = vector.load %arg15[%c0_140, %c0_141] : memref<8x1xf32, #tpu.memory_space<vmem>>, vector<8x1xf32>
      tpu.vector_store %arg15[%c0_140, %c0_141], %227 {strides = array<i32>} : memref<8x1xf32, #tpu.memory_space<vmem>>, vector<8x1xf32>,
    } else {
    }
    %c0 = arith.constant 0 : index
    %c0_1 = arith.constant 0 : index
    %3 = vector.load %arg13[%c0, %c0_1] : memref<8x128xbf16, #tpu.memory_space<vmem>>, vector<8x128xbf16>
    %c0_2 = arith.constant 0 : index
    %c0_3 = arith.constant 0 : index
    %4 = vector.load %arg7[%c0_2, %c0_3] : memref<128x256xbf16, #tpu.memory_space<vmem>>, vector<128x256xbf16>
    %cst = arith.constant dense<0.000000e+00> : vector<8x256xf32>
    %5 = tpu.matmul %3, %4, %cst {dimension_numbers = #tpu.dot_dimension_numbers<[1], [0], [0], [1], [0, 0, 1, 1], [], []>} : vector<8x128xbf16>, vector<128x256xbf16>, vector<8x256xf32> -> vector<8x256xf32>
    %c0_4 = arith.constant 0 : index
    %c0_5 = arith.constant 0 : index
    %6 = vector.load %arg8[%c0_4, %c0_5] : memref<1x256xf32, #tpu.memory_space<vmem>>, vector<1x256xf32>
    %7 = vector.broadcast %6 : vector<1x256xf32> to vector<8x256xf32>
    %8 = arith.addf %5, %7 : vector<8x256xf32>
    %c256_i32 = arith.constant 256 : i32
    %9 = arith.muli %arg0, %c256_i32 : i32
    %10 = tpu.assume_multiple %9, 256 : i32
    %c0_6 = arith.constant 0 : index
    %11 = arith.index_cast %10 : i32 to index
    %12 = vector.load %arg9[%c0_6, %11] : memref<8x1024xf32, #tpu.memory_space<vmem>>, vector<8x256xf32>
    tpu.vector_store %arg9[%c0_6, %11], %8 {strides = array<i32>} : memref<8x1024xf32, #tpu.memory_space<vmem>>, vector<8x256xf32>,
    %c0_7 = arith.constant 0 : index
    %c0_8 = arith.constant 0 : index
    %13 = vector.load %arg14[%c0_7, %c0_8] : memref<8x1xf32, #tpu.memory_space<vmem>>, vector<8x1xf32>
    %cst_9 = arith.constant dense<0xFF800000> : vector<8xf32>
    %14 = vector.multi_reduction <maximumf>, %8, %cst_9 [1] : vector<8x256xf32> to vector<8xf32>
    %15 = vector.shape_cast %14 : vector<8xf32> to vector<8x1xf32>
    %16 = arith.maximumf %13, %15 : vector<8x1xf32>
    %c0_10 = arith.constant 0 : index
    %c0_11 = arith.constant 0 : index
    %17 = vector.load %arg15[%c0_10, %c0_11] : memref<8x1xf32, #tpu.memory_space<vmem>>, vector<8x1xf32>
    %18 = arith.subf %13, %16 : vector<8x1xf32>
    %19 = math.exp %18 : vector<8x1xf32>
    %20 = arith.mulf %17, %19 : vector<8x1xf32>
    %21 = vector.broadcast %16 : vector<8x1xf32> to vector<8x256xf32>
    %22 = arith.subf %8, %21 : vector<8x256xf32>
    %23 = math.exp %22 : vector<8x256xf32>
    %cst_12 = arith.constant dense<0.000000e+00> : vector<8xf32>
    %24 = vector.multi_reduction <add>, %23, %cst_12 [1] : vector<8x256xf32> to vector<8xf32>
    %25 = vector.shape_cast %24 : vector<8xf32> to vector<8x1xf32>
    %26 = arith.addf %20, %25 : vector<8x1xf32>
    %c0_13 = arith.constant 0 : index
    %c0_14 = arith.constant 0 : index
    %27 = vector.load %arg15[%c0_13, %c0_14] : memref<8x1xf32, #tpu.memory_space<vmem>>, vector<8x1xf32>
    tpu.vector_store %arg15[%c0_13, %c0_14], %26 {strides = array<i32>} : memref<8x1xf32, #tpu.memory_space<vmem>>, vector<8x1xf32>,
    %c0_15 = arith.constant 0 : index
    %c0_16 = arith.constant 0 : index
    %28 = vector.load %arg14[%c0_15, %c0_16] : memref<8x1xf32, #tpu.memory_space<vmem>>, vector<8x1xf32>
    tpu.vector_store %arg14[%c0_15, %c0_16], %16 {strides = array<i32>} : memref<8x1xf32, #tpu.memory_space<vmem>>, vector<8x1xf32>,
    %c3_i32 = arith.constant 3 : i32
    %29 = arith.cmpi eq, %arg0, %c3_i32 : i32
    %30 = arith.extui %29 : i1 to i32
    %c0_i32_17 = arith.constant 0 : i32
    %31 = arith.cmpi ne, %30, %c0_i32_17 : i32
    scf.if %31 {
      %c0_18 = arith.constant 0 : index
      %c0_19 = arith.constant 0 : index
      %32 = vector.load %arg15[%c0_18, %c0_19] : memref<8x1xf32, #tpu.memory_space<vmem>>, vector<8x1xf32>
      %33 = tpu.reciprocal %32 : vector<8x1xf32> -> vector<8x1xf32>
      %c0_20 = arith.constant 0 : index
      %c0_21 = arith.constant 0 : index
      %34 = vector.load %arg9[%c0_20, %c0_21] : memref<8x1024xf32, #tpu.memory_space<vmem>>, vector<8x1024xf32>
      %c0_22 = arith.constant 0 : index
      %c0_23 = arith.constant 0 : index
      %35 = vector.load %arg14[%c0_22, %c0_23] : memref<8x1xf32, #tpu.memory_space<vmem>>, vector<8x1xf32>
      %36 = vector.broadcast %35 : vector<8x1xf32> to vector<8x1024xf32>
      %37 = arith.subf %34, %36 : vector<8x1024xf32>
      %38 = math.exp %37 : vector<8x1024xf32>
      %39 = vector.broadcast %33 : vector<8x1xf32> to vector<8x1024xf32>
      %40 = arith.mulf %38, %39 : vector<8x1024xf32>
      %c0_24 = arith.constant 0 : index
      %c0_25 = arith.constant 0 : index
      %41 = vector.load %arg9[%c0_24, %c0_25] : memref<8x1024xf32, #tpu.memory_space<vmem>>, vector<8x1024xf32>
      tpu.vector_store %arg9[%c0_24, %c0_25], %40 {strides = array<i32>} : memref<8x1024xf32, #tpu.memory_space<vmem>>, vector<8x1024xf32>,
    } else {
    }
    return
  }
  func.func @transform_1(%arg0: i32, %arg1: memref<8xi32, #tpu.memory_space<smem>>) -> (i32, i32, i32) {
    %c0_i32 = arith.constant 0 : i32
    %c0_i32_0 = arith.constant 0 : i32
    %c0_i32_1 = arith.constant 0 : i32
    %c0_i32_2 = arith.constant 0 : i32
    return %c0_i32, %c0_i32_0, %c0_i32_1 : i32, i32, i32
  }
  func.func @transform_2(%arg0: i32, %arg1: memref<8xi32, #tpu.memory_space<smem>>) -> (i32, i32, i32) {
    %c0_i32 = arith.constant 0 : i32
    %c0_i32_0 = arith.constant 0 : i32
    %c0_i32_1 = arith.constant 0 : i32
    %c0_i32_2 = arith.constant 0 : i32
    return %c0_i32, %c0_i32_0, %c0_i32_1 : i32, i32, i32
  }
  func.func @transform_3(%arg0: i32, %arg1: memref<8xi32, #tpu.memory_space<smem>>) -> (i32, i32, i32) {
    %c0_i32 = arith.constant 0 : i32
    %c0_i32_0 = arith.constant 0 : i32
    %c0_i32_1 = arith.constant 0 : i32
    %c0_i32_2 = arith.constant 0 : i32
    return %c0_i32, %c0_i32_0, %c0_i32_1 : i32, i32, i32
  }
  func.func @transform_4(%arg0: i32, %arg1: memref<8xi32, #tpu.memory_space<smem>>) -> (i32, i32, i32) {
    %c0_i32 = arith.constant 0 : i32
    %c0_i32_0 = arith.constant 0 : i32
    %c0_i32_1 = arith.constant 0 : i32
    %c0_i32_2 = arith.constant 0 : i32
    return %c0_i32, %c0_i32_0, %c0_i32_1 : i32, i32, i32
  }
  func.func @transform_5(%arg0: i32, %arg1: memref<8xi32, #tpu.memory_space<smem>>) -> (i32, i32) {
    %c0_i32 = arith.constant 0 : i32
    %c0_i32_0 = arith.constant 0 : i32
    return %c0_i32, %arg0 : i32, i32
  }
  func.func @transform_6(%arg0: i32, %arg1: memref<8xi32, #tpu.memory_space<smem>>) -> (i32, i32) {
    %c0_i32 = arith.constant 0 : i32
    %c0_i32_0 = arith.constant 0 : i32
    return %c0_i32, %arg0 : i32, i32
  }
  func.func @transform_7(%arg0: i32, %arg1: memref<8xi32, #tpu.memory_space<smem>>) -> (i32, i32) {
    %c0_i32 = arith.constant 0 : i32
    %c0_i32_0 = arith.constant 0 : i32
    %c0_i32_1 = arith.constant 0 : i32
    return %c0_i32, %c0_i32_0 : i32, i32
  }
  func.func @transform_8(%arg0: i32, %arg1: memref<8xi32, #tpu.memory_space<smem>>) -> (i32, i32, i32) {
    %c0_i32 = arith.constant 0 : i32
    %c0_i32_0 = arith.constant 0 : i32
    %c0_i32_1 = arith.constant 0 : i32
    %c0_i32_2 = arith.constant 0 : i32
    return %c0_i32, %c0_i32_0, %c0_i32_1 : i32, i32, i32
  }
  func.func @transform_9(%arg0: i32, %arg1: memref<8xi32, #tpu.memory_space<smem>>) -> (i32, i32, i32) {
    %c0_i32 = arith.constant 0 : i32
    %c0_i32_0 = arith.constant 0 : i32
    %c0_i32_1 = arith.constant 0 : i32
    %c0_i32_2 = arith.constant 0 : i32
    return %c0_i32, %c0_i32_0, %c0_i32_1 : i32, i32, i32
  }
}

</mosaic_0001>

<llo_original>
// kernel: tpu_custom_call.1
$region0: #{tpu_custom_call.1}
  #allocation0 [shape = 'u32[]', space=smem, size = 0x4, offset = 0x4, fixed_abs, tag = 'smem constant byte address 0x4 - core index']
  #allocation1 [shape = 'u32[144,128]{1,0:T(1,128)}', space=vmem, size = 0x12000, scoped, tag = 'internal scratch']
  #allocation2 [shape = 'f32[8,128]{1,0:T(8,128)}', space=vmem, size = 0x1000, scoped, tag = 'scratch operand']
  #allocation3 [shape = 'bf16[8,128]{1,0:T(8,128)(2,1)}', space=vmem, size = 0x800, scoped, tag = 'scratch operand']
  #allocation4 [shape = 'f32[8,1]{1,0:T(8,128)}', space=vmem, size = 0x1000, scoped, tag = 'scratch operand']
  #allocation5 [shape = 'f32[8,1]{1,0:T(8,128)}', space=vmem, size = 0x1000, scoped, tag = 'scratch operand']
  #allocation6 [shape = 's32[8]{0}', space=sflag, size = 0x20, scoped, tag = 'scratch operand']
  #allocation7 [shape = 's32[1]{0}', space=sflag, size = 0x4, scoped, tag = 'scoped memory for tpu_custom_call.1']
  #allocation8 [shape = 'u8[512]{0}', space=smem, size = 0x200, scoped, tag = 'prefetched SMEM operand 0']
  #allocation22 [shape = 's32[]', space=sflag, size = 0x4, offset = 0, fixed_abs, tag = 'sflag constant byte address 0x0 - dummy sync flag']
  #allocation23 [shape = 's32[]', space=sflag, size = 0x4, offset = 0, fixed_abs, tag = 'sflag constant byte address 0x0 - dummy sync flag']
  #allocation24 [shape = 'u32[]', space=smem, size = 0x4, offset = 0x44, fixed_abs, tag = 'smem constant byte address 0x44 - assertion arg 0']
  #allocation25 [shape = 'u32[]', space=smem, size = 0x4, offset = 0x48, fixed_abs, tag = 'smem constant byte address 0x48 - assertion arg 1']
  #allocation26 [shape = 's32[]', space=sflag, size = 0x4, offset = 0, fixed_abs, tag = 'sflag constant byte address 0x0 - dummy sync flag']
  #allocation27 [shape = 's32[]', space=sflag, size = 0x4, offset = 0, fixed_abs, tag = 'sflag constant byte address 0x0 - dummy sync flag']
  #allocation28 [shape = 's32[]', space=sflag, size = 0x4, offset = 0, fixed_abs, tag = 'sflag constant byte address 0x0 - dummy sync flag']
  #allocation29 [shape = 's32[]', space=sflag, size = 0x4, offset = 0, fixed_abs, tag = 'sflag constant byte address 0x0 - dummy sync flag']
  #allocation30 [shape = 's32[]', space=sflag, size = 0x4, offset = 0, fixed_abs, tag = 'sflag constant byte address 0x0 - dummy sync flag']
  #allocation31 [shape = 's32[]', space=sflag, size = 0x4, offset = 0, fixed_abs, tag = 'sflag constant byte address 0x0 - dummy sync flag']
  #allocation32 [shape = 's32[]', space=sflag, size = 0x4, offset = 0, fixed_abs, tag = 'sflag constant byte address 0x0 - dummy sync flag']
  #allocation33 [shape = 's32[]', space=sflag, size = 0x4, offset = 0, fixed_abs, tag = 'sflag constant byte address 0x0 - dummy sync flag']
  #allocation34 [shape = 's32[]', space=sflag, size = 0x4, offset = 0, fixed_abs, tag = 'sflag constant byte address 0x0 - dummy sync flag']
  #allocation35 [shape = 's32[]', space=sflag, size = 0x4, offset = 0, fixed_abs, tag = 'sflag constant byte address 0x0 - dummy sync flag']
  #allocation36 [shape = 's32[]', space=sflag, size = 0x4, offset = 0, fixed_abs, tag = 'sflag constant byte address 0x0 - dummy sync flag']
  #allocation37 [shape = 's32[]', space=sflag, size = 0x4, offset = 0, fixed_abs, tag = 'sflag constant byte address 0x0 - dummy sync flag']
  #allocation38 [shape = 's32[]', space=sflag, size = 0x4, offset = 0, fixed_abs, tag = 'sflag constant byte address 0x0 - dummy sync flag']
  #allocation39 [shape = 's32[]', space=sflag, size = 0x4, offset = 0, fixed_abs, tag = 'sflag constant byte address 0x0 - dummy sync flag']
  %s0 = inlined_call_operand.hbm [shape: s32[8], index: 0, kind: input, shape index: {}]
  %s1 = inlined_call_operand.hbm [shape: f32[1024,128], index: 1, kind: input, shape index: {}]
  %s2 = inlined_call_operand.hbm [shape: f32[2,8,128], index: 2, kind: input, shape index: {}]
  %s3 = inlined_call_operand.hbm [shape: f32[2,8,128], index: 3, kind: input, shape index: {}]
  %s4 = inlined_call_operand.hbm [shape: bf16[2,256,512], index: 4, kind: input, shape index: {}]
  %s5 = inlined_call_operand.vmem [shape: f32[2,1,512], index: 5, kind: input, shape index: {}]
  %s6 = inlined_call_operand.hbm [shape: bf16[128,1024], index: 6, kind: input, shape index: {}]
  %s7 = inlined_call_operand.hbm [shape: f32[1,1024], index: 7, kind: input, shape index: {}]
  %s8 = inlined_call_operand.hbm [shape: f32[8,1024], index: 8, kind: output, shape index: {0}]
  %s9 = inlined_call_operand.hbm [shape: f32[2,8,128], index: 9, kind: output, shape index: {1}]
  %s10 = inlined_call_operand.hbm [shape: f32[2,8,128], index: 10, kind: output, shape index: {2}]
  %11 = xla_tuple %s8, %s9, %s10
  %s12 = sld [smem:[#allocation0]]
  $region133: #{tpu_custom_call.1} parent=0
    _
  %s14 = ssub.s32 1, %s12
  %s15 = scalar_select 0, %s14, %s12
  %17 = dma.hbm_to_smem %s0, 16, [#allocation8], [#allocation7]
  %18 = dma.done [#allocation7], 16
  %19 = sfence
  $region1: #{tpu_custom_call.1} parent=0
    #allocation9 [shape = 'u8[8192]{0}', space=vmem, size = 0x2000, scoped, tag = 'input window, operand 2, single buffered']
    #allocation10 [shape = 's32[2]{0}', space=sflag, size = 0x8, scoped, tag = 'scoped memory for tpu_custom_call.1']
    #allocation11 [shape = 's32[2]{0}', space=sflag, size = 0x8, scoped, tag = 'scoped memory for tpu_custom_call.1']
    #allocation12 [shape = 'u8[8192]{0}', space=vmem, size = 0x2000, scoped, tag = 'input window, operand 3, single buffered']
    #allocation13 [shape = 's32[1]{0}', space=sflag, size = 0x4, scoped, tag = 'scoped memory for tpu_custom_call.1']
    #allocation14 [shape = 'u8[524288]{0}', space=vmem, size = 0x80000, scoped, tag = 'input window, operand 4, single buffered']
    #allocation15 [shape = 'u8[131072]{0}', space=vmem, size = 0x20000, scoped, tag = 'input window, operand 6']
    #allocation16 [shape = 's32[2]{0}', space=sflag, size = 0x8, scoped, tag = 'scoped memory for tpu_custom_call.1']
    #allocation17 [shape = 'u8[2048]{0}', space=vmem, size = 0x800, scoped, tag = 'input window, operand 7']
    #allocation18 [shape = 'u8[32768]{0}', space=vmem, size = 0x8000, scoped, tag = 'output window, operand 0, single buffered']
    #allocation19 [shape = 'u8[8192]{0}', space=vmem, size = 0x2000, scoped, tag = 'output window, operand 1, single buffered']
    #allocation20 [shape = 's32[1]{0}', space=sflag, size = 0x4, scoped, tag = 'scoped memory for tpu_custom_call.1']
    #allocation21 [shape = 'u8[8192]{0}', space=vmem, size = 0x2000, scoped, tag = 'output window, operand 2, single buffered']
    %20 = vsyncpa [#allocation10], 0
    %21 = vsyncpa [#allocation13], 0
    %22 = vsyncpa [#allocation16], 0
    %s23 = scalar_lea.sflag [#allocation16], 1
    %24 = vsyncpa %s23, 0
    %25 = vsyncpa [#allocation11], 0
    %26 = vsyncpa [#allocation20], 0
    loop: start=0, step=1, limit=6
    $region2: #{tpu_custom_call.1} parent=1 // loop_pre_header
      _
    $region3: #{tpu_custom_call.1} parent=1 // loop_header
      %s28 = sphi 0, %s32
      %p29 = scmp.ge.s32.totalorder %s28, 6
      %s36 = sphi 0, %s36
      %s38 = sphi 0, %s36
      %s39 = sphi 0, %s38
      %s53 = sphi 0, %s39
      %s57 = sphi 0, %s57
      %s59 = sphi 0, %s57
      %s60 = sphi 0, %s59
      %s74 = sphi 0, %s60
      %s78 = sphi 0, %s78
      %s80 = sphi 0, %s78
      %s81 = sphi 0, %s80
      %s95 = sphi 0, %s81
      %s99 = sphi 0, %s99
      %s101 = sphi 0, %s99
      %s102 = sphi 0, %s101
      %s116 = sphi 0, %s102
      %s122 = sphi 0, %s124
      %s125 = sphi 0, %s122
      %s126 = sphi 0, %s125
      %s142 = sphi 0, %s126
      %s148 = sphi 0, %s150
      %s151 = sphi 0, %s148
      %s152 = sphi 0, %s151
      %s168 = sphi 0, %s152
      %s172 = sphi 0, %s172
      %s174 = sphi 0, %s172
      %s175 = sphi 0, %s174
      %s189 = sphi 0, %s175
      %s193 = sphi 0, %s193
      %s195 = sphi 0, %s193
      %s196 = sphi 0, %s195
      %s210 = sphi 0, %s196
      %s214 = sphi 0, %s214
      %s216 = sphi 0, %s214
      %s217 = sphi 0, %s216
      %s231 = sphi 0, %s217
    $region4: #{tpu_custom_call.1} parent=1 // loop_header_branch
      %31 = sbr.rel (%p29) target = $region8
    $region5: #{tpu_custom_call.1} parent=1 // loop_body
      %s33 = ssub.s32 %s28, 1
      %s34 = ssub.s32 %s28, 2
      %s35 = sadd.s32 %s28, 1
      %s37 = sadd.s32 %s36, 1
      %p40 = scmp.eq.s32.totalorder %s28, 3
      %p41 = scmp.ne.s32.totalorder %s36, %s38
      %p42 = scmp.eq.s32.totalorder %s28, 0
      %p43 = por %p41, %p42
      %p44 = scmp.ne.s32.totalorder %s36, %s38
      %p45 = scmp.eq.s32.totalorder %s33, 3
      %p46 = por %p44, %p45
      %p47 = scmp.ne.s32.totalorder %s38, %s39
      %p48 = scmp.eq.s32.totalorder %s33, 0
      %p49 = por %p47, %p48
      %p50 = scmp.ne.s32.totalorder %s38, %s39
      %p51 = scmp.eq.s32.totalorder %s34, 3
      %p52 = por %p50, %p51
      %p54 = scmp.ne.s32.totalorder %s39, %s53
      %p55 = scmp.eq.s32.totalorder %s34, 0
      %p56 = por %p54, %p55
      %s58 = sadd.s32 %s57, 1
      %p61 = scmp.eq.s32.totalorder %s28, 3
      %p62 = scmp.ne.s32.totalorder %s57, %s59
      %p63 = scmp.eq.s32.totalorder %s28, 0
      %p64 = por %p62, %p63
      %p65 = scmp.ne.s32.totalorder %s57, %s59
      %p66 = scmp.eq.s32.totalorder %s33, 3
      %p67 = por %p65, %p66
      %p68 = scmp.ne.s32.totalorder %s59, %s60
      %p69 = scmp.eq.s32.totalorder %s33, 0
      %p70 = por %p68, %p69
      %p71 = scmp.ne.s32.totalorder %s59, %s60
      %p72 = scmp.eq.s32.totalorder %s34, 3
      %p73 = por %p71, %p72
      %p75 = scmp.ne.s32.totalorder %s60, %s74
      %p76 = scmp.eq.s32.totalorder %s34, 0
      %p77 = por %p75, %p76
      %s79 = sadd.s32 %s78, 1
      %p82 = scmp.eq.s32.totalorder %s28, 3
      %p83 = scmp.ne.s32.totalorder %s78, %s80
      %p84 = scmp.eq.s32.totalorder %s28, 0
      %p85 = por %p83, %p84
      %p86 = scmp.ne.s32.totalorder %s78, %s80
      %p87 = scmp.eq.s32.totalorder %s33, 3
      %p88 = por %p86, %p87
      %p89 = scmp.ne.s32.totalorder %s80, %s81
      %p90 = scmp.eq.s32.totalorder %s33, 0
      %p91 = por %p89, %p90
      %p92 = scmp.ne.s32.totalorder %s80, %s81
      %p93 = scmp.eq.s32.totalorder %s34, 3
      %p94 = por %p92, %p93
      %p96 = scmp.ne.s32.totalorder %s81, %s95
      %p97 = scmp.eq.s32.totalorder %s34, 0
      %p98 = por %p96, %p97
      %s100 = sadd.s32 %s99, 1
      %p103 = scmp.eq.s32.totalorder %s28, 3
      %p104 = scmp.ne.s32.totalorder %s99, %s101
      %p105 = scmp.eq.s32.totalorder %s28, 0
      %p106 = por %p104, %p105
      %p107 = scmp.ne.s32.totalorder %s99, %s101
      %p108 = scmp.eq.s32.totalorder %s33, 3
      %p109 = por %p107, %p108
      %p110 = scmp.ne.s32.totalorder %s101, %s102
      %p111 = scmp.eq.s32.totalorder %s33, 0
      %p112 = por %p110, %p111
      %p113 = scmp.ne.s32.totalorder %s101, %s102
      %p114 = scmp.eq.s32.totalorder %s34, 3
      %p115 = por %p113, %p114
      %p117 = scmp.ne.s32.totalorder %s102, %s116
      %p118 = scmp.eq.s32.totalorder %s34, 0
      %p119 = por %p117, %p118
      %s120 = ssub.s32 %s28, %s35
      %p121 = scmp.eq.s32.totalorder %s120, 0
      %s123 = sadd.s32 %s122, 1
      %s124 = scalar_select %p121, %s122, %s123
      %p127 = pneg %p121
      %p128 = scmp.eq.s32.totalorder %s28, 3
      %p129 = por %p127, %p128
      %p130 = scmp.ne.s32.totalorder %s122, %s125
      %p131 = scmp.eq.s32.totalorder %s28, 0
      %p132 = por %p130, %p131
      %p133 = scmp.ne.s32.totalorder %s122, %s125
      %p134 = scmp.eq.s32.totalorder %s33, 3
      %p135 = por %p133, %p134
      %p136 = scmp.ne.s32.totalorder %s125, %s126
      %p137 = scmp.eq.s32.totalorder %s33, 0
      %p138 = por %p136, %p137
      %p139 = scmp.ne.s32.totalorder %s125, %s126
      %p140 = scmp.eq.s32.totalorder %s34, 3
      %p141 = por %p139, %p140
      %p143 = scmp.ne.s32.totalorder %s126, %s142
      %p144 = scmp.eq.s32.totalorder %s34, 0
      %p145 = por %p143, %p144
      %s146 = ssub.s32 %s28, %s35
      %p147 = scmp.eq.s32.totalorder %s146, 0
      %s149 = sadd.s32 %s148, 1
      %s150 = scalar_select %p147, %s148, %s149
      %p153 = pneg %p147
      %p154 = scmp.eq.s32.totalorder %s28, 3
      %p155 = por %p153, %p154
      %p156 = scmp.ne.s32.totalorder %s148, %s151
      %p157 = scmp.eq.s32.totalorder %s28, 0
      %p158 = por %p156, %p157
      %p159 = scmp.ne.s32.totalorder %s148, %s151
      %p160 = scmp.eq.s32.totalorder %s33, 3
      %p161 = por %p159, %p160
      %p162 = scmp.ne.s32.totalorder %s151, %s152
      %p163 = scmp.eq.s32.totalorder %s33, 0
      %p164 = por %p162, %p163
      %p165 = scmp.ne.s32.totalorder %s151, %s152
      %p166 = scmp.eq.s32.totalorder %s34, 3
      %p167 = por %p165, %p166
      %p169 = scmp.ne.s32.totalorder %s152, %s168
      %p170 = scmp.eq.s32.totalorder %s34, 0
      %p171 = por %p169, %p170
      %s173 = sadd.s32 %s172, 1
      %p176 = scmp.eq.s32.totalorder %s28, 3
      %p177 = scmp.ne.s32.totalorder %s172, %s174
      %p178 = scmp.eq.s32.totalorder %s28, 0
      %p179 = por %p177, %p178
      %p180 = scmp.ne.s32.totalorder %s172, %s174
      %p181 = scmp.eq.s32.totalorder %s33, 3
      %p182 = por %p180, %p181
      %p183 = scmp.ne.s32.totalorder %s174, %s175
      %p184 = scmp.eq.s32.totalorder %s33, 0
      %p185 = por %p183, %p184
      %p186 = scmp.ne.s32.totalorder %s174, %s175
      %p187 = scmp.eq.s32.totalorder %s34, 3
      %p188 = por %p186, %p187
      %p190 = scmp.ne.s32.totalorder %s175, %s189
      %p191 = scmp.eq.s32.totalorder %s34, 0
      %p192 = por %p190, %p191
      %s194 = sadd.s32 %s193, 1
      %p197 = scmp.eq.s32.totalorder %s28, 3
      %p198 = scmp.ne.s32.totalorder %s193, %s195
      %p199 = scmp.eq.s32.totalorder %s28, 0
      %p200 = por %p198, %p199
      %p201 = scmp.ne.s32.totalorder %s193, %s195
      %p202 = scmp.eq.s32.totalorder %s33, 3
      %p203 = por %p201, %p202
      %p204 = scmp.ne.s32.totalorder %s195, %s196
      %p205 = scmp.eq.s32.totalorder %s33, 0
      %p206 = por %p204, %p205
      %p207 = scmp.ne.s32.totalorder %s195, %s196
      %p208 = scmp.eq.s32.totalorder %s34, 3
      %p209 = por %p207, %p208
      %p211 = scmp.ne.s32.totalorder %s196, %s210
      %p212 = scmp.eq.s32.totalorder %s34, 0
      %p213 = por %p211, %p212
      %s215 = sadd.s32 %s214, 1
      %p218 = scmp.eq.s32.totalorder %s28, 3
      %p219 = scmp.ne.s32.totalorder %s214, %s216
      %p220 = scmp.eq.s32.totalorder %s28, 0
      %p221 = por %p219, %p220
      %p222 = scmp.ne.s32.totalorder %s214, %s216
      %p223 = scmp.eq.s32.totalorder %s33, 3
      %p224 = por %p222, %p223
      %p225 = scmp.ne.s32.totalorder %s216, %s217
      %p226 = scmp.eq.s32.totalorder %s33, 0
      %p227 = por %p225, %p226
      %p228 = scmp.ne.s32.totalorder %s216, %s217
      %p229 = scmp.eq.s32.totalorder %s34, 3
      %p230 = por %p228, %p229
      %p232 = scmp.ne.s32.totalorder %s217, %s231
      %p233 = scmp.eq.s32.totalorder %s34, 0
      %p234 = por %p232, %p233
      %p235 = scmp.le.s32.totalorder 1, %s28
      %p236 = scmp.lt.s32.totalorder %s28, 5
      %p237 = pnand %p235, %p236
      %p238 = pneg %p237
      // Predicated region
      $region9: #{tpu_custom_call.1} parent=5 // pred_check
        _
      $region10: #{tpu_custom_call.1} parent=5 // pred_check_branch
        %240 = sbr.rel (%p237) target = $region12
      $region11: #{tpu_custom_call.1} parent=5 // pred_region
        %s241 = ssub.s32 %s28, 1
        // Predicated region
        $region13: #{tpu_custom_call.1} parent=11 // pred_check
          %p242 = pneg %p49
        $region14: #{tpu_custom_call.1} parent=11 // pred_check_branch
          %244 = sbr.rel (%p242) target = $region16
        $region15: #{tpu_custom_call.1} parent=11 // pred_region
          %s246 = ssub.s32 256, 256
          %247 = vsyncadd [#allocation10], %s246
          %s248 = sshll.u32 [#allocation9], 4
          %s249 = int_to_ptr.vmem [resolvable:$true] %s248
          %254 = dma.hbm_to_vmem [thread:$0]  %s2, 256, %s249, [#allocation10], 128, 128, 8
        $region16: #{tpu_custom_call.1} parent=11 // pred_fallthru
          _
        // Predicated region
        $region17: #{tpu_custom_call.1} parent=11 // pred_check
          %p255 = pneg %p70
        $region18: #{tpu_custom_call.1} parent=11 // pred_check_branch
          %257 = sbr.rel (%p255) target = $region20
        $region19: #{tpu_custom_call.1} parent=11 // pred_region
          %s259 = ssub.s32 256, 256
          %260 = vsyncadd [#allocation13], %s259
          %s261 = sshll.u32 [#allocation12], 4
          %s262 = int_to_ptr.vmem [resolvable:$true] %s261
          %267 = dma.hbm_to_vmem [thread:$0]  %s3, 256, %s262, [#allocation13], 128, 128, 8
        $region20: #{tpu_custom_call.1} parent=11 // pred_fallthru
          _
        // Predicated region
        $region21: #{tpu_custom_call.1} parent=11 // pred_check
          %p268 = pneg %p91
        $region22: #{tpu_custom_call.1} parent=11 // pred_check_branch
          %270 = sbr.rel (%p268) target = $region24
        $region23: #{tpu_custom_call.1} parent=11 // pred_region
          %s272 = ssub.s32 16384, 16384
          %273 = vsyncadd [#allocation13], %s272
          %s274 = sshll.u32 [#allocation14], 4
          %s275 = int_to_ptr.vmem [resolvable:$true] %s274
          %280 = dma.hbm_to_vmem [thread:$0]  %s4, 16384, %s275, [#allocation13], 256, 256, 16
        $region24: #{tpu_custom_call.1} parent=11 // pred_fallthru
          _
        // Predicated region
        $region25: #{tpu_custom_call.1} parent=11 // pred_check
          %p281 = pneg %p112
        $region26: #{tpu_custom_call.1} parent=11 // pred_check_branch
          %283 = sbr.rel (%p281) target = $region28
        $region27: #{tpu_custom_call.1} parent=11 // pred_region
          _
        $region28: #{tpu_custom_call.1} parent=11 // pred_fallthru
          _
      $region12: #{tpu_custom_call.1} parent=5 // pred_fallthru
        _
      %p284 = scmp.lt.s32.totalorder %s28, 4
      // Predicated region
      $region29: #{tpu_custom_call.1} parent=5 // pred_check
        %p285 = pneg %p284
      $region30: #{tpu_custom_call.1} parent=5 // pred_check_branch
        %287 = sbr.rel (%p285) target = $region32
      $region31: #{tpu_custom_call.1} parent=5 // pred_region
        // Predicated region
        $region33: #{tpu_custom_call.1} parent=31 // pred_check
          %p288 = pneg %p132
        $region34: #{tpu_custom_call.1} parent=31 // pred_check_branch
          %290 = sbr.rel (%p288) target = $region36
        $region35: #{tpu_custom_call.1} parent=31 // pred_region
          %s291 = sand.u32 %s28, 1
          %s292 = scalar_lea.sflag [#allocation16], %s291
          %s293 = sand.u32 %s122, 1
          %s294 = smul.addr %s293, 128
          %s295 = scalar_lea.vmem [#allocation15], %s294
          %s296 = smul.u32 2, %s28
          %s298 = ssub.s32 2048, 2048
          %299 = vsyncadd %s292, %s298
          %s300 = smul.addr %s296, 64
          %s301 = scalar_lea.hbm %s6, %s300
          %s302 = sshll.u32 %s295, 4
          %s303 = int_to_ptr.vmem [resolvable:$true] %s302
          %308 = dma.hbm_to_vmem [thread:$0]  %s301, 2048, %s303, %s292, 512, 128, 8
        $region36: #{tpu_custom_call.1} parent=31 // pred_fallthru
          _
        // Predicated region
        $region37: #{tpu_custom_call.1} parent=31 // pred_check
          %p309 = pneg %p158
        $region38: #{tpu_custom_call.1} parent=31 // pred_check_branch
          %311 = sbr.rel (%p309) target = $region40
        $region39: #{tpu_custom_call.1} parent=31 // pred_region
          %s312 = sand.u32 %s28, 1
          %s313 = scalar_lea.sflag [#allocation16], %s312
          %s314 = sand.u32 %s148, 1
          %s315 = smul.addr %s314, 2
          %s316 = scalar_lea.vmem [#allocation17], %s315
          %s317 = smul.u32 2, %s28
          %s319 = ssub.s32 32, 32
          %320 = vsyncadd %s313, %s319
          %s321 = smul.addr %s317, 16
          %s322 = scalar_lea.hbm %s7, %s321
          %s324 = sshll.u32 %s316, 4
          %s325 = int_to_ptr.vmem [resolvable:$true] %s324
          %327 = dma.hbm_to_vmem [thread:$0]  %s322, 32, %s325, %s313
        $region40: #{tpu_custom_call.1} parent=31 // pred_fallthru
          _
      $region32: #{tpu_custom_call.1} parent=5 // pred_fallthru
        _
      %p328 = scmp.le.s32.totalorder 1, %s28
      %p329 = scmp.lt.s32.totalorder %s28, 5
      %p330 = pnand %p328, %p329
      %p331 = pneg %p330
      // Predicated region
      $region41: #{tpu_custom_call.1} parent=5 // pred_check
        _
      $region42: #{tpu_custom_call.1} parent=5 // pred_check_branch
        %333 = sbr.rel (%p330) target = $region44
      $region43: #{tpu_custom_call.1} parent=5 // pred_region
        %s334 = ssub.s32 %s28, 1
        // Predicated region
        $region45: #{tpu_custom_call.1} parent=43 // pred_check
          %p335 = pneg %p49
        $region46: #{tpu_custom_call.1} parent=43 // pred_check_branch
          %337 = sbr.rel (%p335) target = $region48
        $region47: #{tpu_custom_call.1} parent=43 // pred_region
          %338 = dma.done [#allocation10], 256
        $region48: #{tpu_custom_call.1} parent=43 // pred_fallthru
          _
        // Predicated region
        $region49: #{tpu_custom_call.1} parent=43 // pred_check
          %p339 = pneg %p70
        $region50: #{tpu_custom_call.1} parent=43 // pred_check_branch
          %341 = sbr.rel (%p339) target = $region52
        $region51: #{tpu_custom_call.1} parent=43 // pred_region
          %342 = dma.done [#allocation13], 256
        $region52: #{tpu_custom_call.1} parent=43 // pred_fallthru
          _
        // Predicated region
        $region53: #{tpu_custom_call.1} parent=43 // pred_check
          %p343 = pneg %p91
        $region54: #{tpu_custom_call.1} parent=43 // pred_check_branch
          %345 = sbr.rel (%p343) target = $region56
        $region55: #{tpu_custom_call.1} parent=43 // pred_region
          %346 = dma.done [#allocation13], 16384
        $region56: #{tpu_custom_call.1} parent=43 // pred_fallthru
          _
        %s347 = sand.u32 %s33, 1
        %s348 = scalar_lea.sflag [#allocation16], %s347
        %s349 = sand.u32 %s125, 1
        %s350 = smul.addr %s349, 128
        %s351 = scalar_lea.vmem [#allocation15], %s350
        // Predicated region
        $region57: #{tpu_custom_call.1} parent=43 // pred_check
          %p352 = pneg %p138
        $region58: #{tpu_custom_call.1} parent=43 // pred_check_branch
          %354 = sbr.rel (%p352) target = $region60
        $region59: #{tpu_custom_call.1} parent=43 // pred_region
          %355 = dma.done %s348, 2048
        $region60: #{tpu_custom_call.1} parent=43 // pred_fallthru
          _
        %s356 = sand.u32 %s33, 1
        %s357 = scalar_lea.sflag [#allocation16], %s356
        %s358 = sand.u32 %s151, 1
        %s359 = smul.addr %s358, 2
        %s360 = scalar_lea.vmem [#allocation17], %s359
        // Predicated region
        $region61: #{tpu_custom_call.1} parent=43 // pred_check
          %p361 = pneg %p164
        $region62: #{tpu_custom_call.1} parent=43 // pred_check_branch
          %363 = sbr.rel (%p361) target = $region64
        $region63: #{tpu_custom_call.1} parent=43 // pred_region
          %364 = dma.done %s357, 32
        $region64: #{tpu_custom_call.1} parent=43 // pred_fallthru
          _
        %p365 = pneg %p49
        %p366 = pneg %p46
        %p367 = pneg %p70
        %p368 = pneg %p67
        %p369 = pneg %p91
        %p370 = pneg %p88
        %p371 = pneg %p112
        %p372 = pneg %p109
        %s373 = sand.u32 %s33, 1
        %s374 = scalar_lea.sflag [#allocation16], %s373
        %s375 = sand.u32 %s125, 1
        %s376 = smul.addr %s375, 128
        %s377 = scalar_lea.vmem [#allocation15], %s376
        %p378 = pneg %p138
        %p379 = pneg %p135
        %s380 = sand.u32 %s33, 1
        %s381 = scalar_lea.sflag [#allocation16], %s380
        %s382 = sand.u32 %s151, 1
        %s383 = smul.addr %s382, 2
        %s384 = scalar_lea.vmem [#allocation17], %s383
        %p385 = pneg %p164
        %p386 = pneg %p161
        %p387 = pneg %p185
        %p388 = pneg %p182
        %p389 = pneg %p206
        %p390 = pneg %p203
        %p391 = pneg %p227
        %p392 = pneg %p224
        %s393 = smul.u32 2, %s33
        %s394 = smul.u32 2, %s33
        %p396 = scmp.eq.s32.totalorder %s33, 0
        // Predicated region
        $region65: #{tpu_custom_call.1} parent=43 // pred_check
          %p397 = pneg %p396
        $region66: #{tpu_custom_call.1} parent=43 // pred_check_branch
          %399 = sbr.rel (%p397) target = $region68
        $region67: #{tpu_custom_call.1} parent=43 // pred_region
          %s400 = sld [smem:[#allocation8]]
          %p401 = scmp.gt.s32.totalorder %s400, 0
          %s402 = scalar_select %p401, %s400, 0
          %p403 = scmp.lt.s32.totalorder %s402, 1023
          %s404 = scalar_select %p403, %s402, 1023
          %s405 = smul.addr %s404, 16
          %s406 = scalar_lea.hbm %s1, %s405
          // Predicated region
          $region69: #{tpu_custom_call.1} parent=67 // pred_check
            _
          $region70: #{tpu_custom_call.1} parent=67 // pred_check_branch
            %408 = sbr.rel target = $region72
          $region71: #{tpu_custom_call.1} parent=67 // pred_region
            %409 = sst [smem:[#allocation24]] [#allocation23]
            %410 = sst [smem:[#allocation25]] [#allocation22]
          $region72: #{tpu_custom_call.1} parent=67 // pred_fallthru
            _
          %412 = shalt.err (0)
          %s414 = sshll.u32 [#allocation2], 4
          %s415 = int_to_ptr.vmem [resolvable:$true] %s414
          %417 = dma.hbm_to_vmem [thread:$0]  %s406, 16, %s415, [#allocation6]
          %s418 = sld [smem:[#allocation8 + $0x1]]
          %p419 = scmp.gt.s32.totalorder %s418, 0
          %s420 = scalar_select %p419, %s418, 0
          %p421 = scmp.lt.s32.totalorder %s420, 1023
          %s422 = scalar_select %p421, %s420, 1023
          %s423 = smul.addr %s422, 16
          %s424 = scalar_lea.hbm %s1, %s423
          %s425 = scalar_lea.vmem [#allocation2], 1
          %s426 = scalar_lea.sflag [#allocation6], 1
          // Predicated region
          $region73: #{tpu_custom_call.1} parent=67 // pred_check
            _
          $region74: #{tpu_custom_call.1} parent=67 // pred_check_branch
            %428 = sbr.rel target = $region76
          $region75: #{tpu_custom_call.1} parent=67 // pred_region
            %429 = sst [smem:[#allocation24]] [#allocation27]
            %430 = sst [smem:[#allocation25]] [#allocation26]
          $region76: #{tpu_custom_call.1} parent=67 // pred_fallthru
            _
          %432 = shalt.err (0)
          %s434 = sshll.u32 %s425, 4
          %s435 = int_to_ptr.vmem [resolvable:$true] %s434
          %437 = dma.hbm_to_vmem [thread:$0]  %s424, 16, %s435, %s426
          %s438 = sld [smem:[#allocation8 + $0x2]]
          %p439 = scmp.gt.s32.totalorder %s438, 0
          %s440 = scalar_select %p439, %s438, 0
          %p441 = scmp.lt.s32.totalorder %s440, 1023
          %s442 = scalar_select %p441, %s440, 1023
          %s443 = smul.addr %s442, 16
          %s444 = scalar_lea.hbm %s1, %s443
          %s445 = scalar_lea.vmem [#allocation2], 2
          %s446 = scalar_lea.sflag [#allocation6], 2
          // Predicated region
          $region77: #{tpu_custom_call.1} parent=67 // pred_check
            _
          $region78: #{tpu_custom_call.1} parent=67 // pred_check_branch
            %448 = sbr.rel target = $region80
          $region79: #{tpu_custom_call.1} parent=67 // pred_region
            %449 = sst [smem:[#allocation24]] [#allocation29]
            %450 = sst [smem:[#allocation25]] [#allocation28]
          $region80: #{tpu_custom_call.1} parent=67 // pred_fallthru
            _
          %452 = shalt.err (0)
          %s454 = sshll.u32 %s445, 4
          %s455 = int_to_ptr.vmem [resolvable:$true] %s454
          %457 = dma.hbm_to_vmem [thread:$0]  %s444, 16, %s455, %s446
          %s458 = sld [smem:[#allocation8 + $0x3]]
          %p459 = scmp.gt.s32.totalorder %s458, 0
          %s460 = scalar_select %p459, %s458, 0
          %p461 = scmp.lt.s32.totalorder %s460, 1023
          %s462 = scalar_select %p461, %s460, 1023
          %s463 = smul.addr %s462, 16
          %s464 = scalar_lea.hbm %s1, %s463
          %s465 = scalar_lea.vmem [#allocation2], 3
          %s466 = scalar_lea.sflag [#allocation6], 3
          // Predicated region
          $region81: #{tpu_custom_call.1} parent=67 // pred_check
            _
          $region82: #{tpu_custom_call.1} parent=67 // pred_check_branch
            %468 = sbr.rel target = $region84
          $region83: #{tpu_custom_call.1} parent=67 // pred_region
            %469 = sst [smem:[#allocation24]] [#allocation31]
            %470 = sst [smem:[#allocation25]] [#allocation30]
          $region84: #{tpu_custom_call.1} parent=67 // pred_fallthru
            _
          %472 = shalt.err (0)
          %s474 = sshll.u32 %s465, 4
          %s475 = int_to_ptr.vmem [resolvable:$true] %s474
          %477 = dma.hbm_to_vmem [thread:$0]  %s464, 16, %s475, %s466
          %s478 = sld [smem:[#allocation8 + $0x4]]
          %p479 = scmp.gt.s32.totalorder %s478, 0
          %s480 = scalar_select %p479, %s478, 0
          %p481 = scmp.lt.s32.totalorder %s480, 1023
          %s482 = scalar_select %p481, %s480, 1023
          %s483 = smul.addr %s482, 16
          %s484 = scalar_lea.hbm %s1, %s483
          %s485 = scalar_lea.vmem [#allocation2], 4
          %s486 = scalar_lea.sflag [#allocation6], 4
          // Predicated region
          $region85: #{tpu_custom_call.1} parent=67 // pred_check
            _
          $region86: #{tpu_custom_call.1} parent=67 // pred_check_branch
            %488 = sbr.rel target = $region88
          $region87: #{tpu_custom_call.1} parent=67 // pred_region
            %489 = sst [smem:[#allocation24]] [#allocation33]
            %490 = sst [smem:[#allocation25]] [#allocation32]
          $region88: #{tpu_custom_call.1} parent=67 // pred_fallthru
            _
          %492 = shalt.err (0)
          %s494 = sshll.u32 %s485, 4
          %s495 = int_to_ptr.vmem [resolvable:$true] %s494
          %497 = dma.hbm_to_vmem [thread:$0]  %s484, 16, %s495, %s486
          %s498 = sld [smem:[#allocation8 + $0x5]]
          %p499 = scmp.gt.s32.totalorder %s498, 0
          %s500 = scalar_select %p499, %s498, 0
          %p501 = scmp.lt.s32.totalorder %s500, 1023
          %s502 = scalar_select %p501, %s500, 1023
          %s503 = smul.addr %s502, 16
          %s504 = scalar_lea.hbm %s1, %s503
          %s505 = scalar_lea.vmem [#allocation2], 5
          %s506 = scalar_lea.sflag [#allocation6], 5
          // Predicated region
          $region89: #{tpu_custom_call.1} parent=67 // pred_check
            _
          $region90: #{tpu_custom_call.1} parent=67 // pred_check_branch
            %508 = sbr.rel target = $region92
          $region91: #{tpu_custom_call.1} parent=67 // pred_region
            %509 = sst [smem:[#allocation24]] [#allocation35]
            %510 = sst [smem:[#allocation25]] [#allocation34]
          $region92: #{tpu_custom_call.1} parent=67 // pred_fallthru
            _
          %512 = shalt.err (0)
          %s514 = sshll.u32 %s505, 4
          %s515 = int_to_ptr.vmem [resolvable:$true] %s514
          %517 = dma.hbm_to_vmem [thread:$0]  %s504, 16, %s515, %s506
          %s518 = sld [smem:[#allocation8 + $0x6]]
          %p519 = scmp.gt.s32.totalorder %s518, 0
          %s520 = scalar_select %p519, %s518, 0
          %p521 = scmp.lt.s32.totalorder %s520, 1023
          %s522 = scalar_select %p521, %s520, 1023
          %s523 = smul.addr %s522, 16
          %s524 = scalar_lea.hbm %s1, %s523
          %s525 = scalar_lea.vmem [#allocation2], 6
          %s526 = scalar_lea.sflag [#allocation6], 6
          // Predicated region
          $region93: #{tpu_custom_call.1} parent=67 // pred_check
            _
          $region94: #{tpu_custom_call.1} parent=67 // pred_check_branch
            %528 = sbr.rel target = $region96
          $region95: #{tpu_custom_call.1} parent=67 // pred_region
            %529 = sst [smem:[#allocation24]] [#allocation37]
            %530 = sst [smem:[#allocation25]] [#allocation36]
          $region96: #{tpu_custom_call.1} parent=67 // pred_fallthru
            _
          %532 = shalt.err (0)
          %s534 = sshll.u32 %s525, 4
          %s535 = int_to_ptr.vmem [resolvable:$true] %s534
          %537 = dma.hbm_to_vmem [thread:$0]  %s524, 16, %s535, %s526
          %s538 = sld [smem:[#allocation8 + $0x7]]
          %p539 = scmp.gt.s32.totalorder %s538, 0
          %s540 = scalar_select %p539, %s538, 0
          %p541 = scmp.lt.s32.totalorder %s540, 1023
          %s542 = scalar_select %p541, %s540, 1023
          %s543 = smul.addr %s542, 16
          %s544 = scalar_lea.hbm %s1, %s543
          %s545 = scalar_lea.vmem [#allocation2], 7
          %s546 = scalar_lea.sflag [#allocation6], 7
          // Predicated region
          $region97: #{tpu_custom_call.1} parent=67 // pred_check
            _
          $region98: #{tpu_custom_call.1} parent=67 // pred_check_branch
            %548 = sbr.rel target = $region100
          $region99: #{tpu_custom_call.1} parent=67 // pred_region
            %549 = sst [smem:[#allocation24]] [#allocation39]
            %550 = sst [smem:[#allocation25]] [#allocation38]
          $region100: #{tpu_custom_call.1} parent=67 // pred_fallthru
            _
          %552 = shalt.err (0)
          %s554 = sshll.u32 %s545, 4
          %s555 = int_to_ptr.vmem [resolvable:$true] %s554
          %557 = dma.hbm_to_vmem [thread:$0]  %s544, 16, %s555, %s546
          %559 = dma.done [#allocation6], 16
          %561 = dma.done %s426, 16
          %563 = dma.done %s446, 16
          %565 = dma.done %s466, 16
          %567 = dma.done %s486, 16
          %569 = dma.done %s506, 16
          %571 = dma.done %s526, 16
          %573 = dma.done %s546, 16
          %v574 = vld [vmem:[#allocation2] sm:$0xff]
          %v575 = vld [vmem:[#allocation9] sm:$0xff]
          %v576 = vld [vmem:[#allocation12] sm:$0xff]
          %v577 = vpack.c.bf16 %v574, %v574
          %v578 = vpack.c.bf16 %v575, %v575
          %v579 = vld [vmem:[#allocation14] sm:$0xff]
          %v580 = vld [vmem:[#allocation14 + $0x8] sm:$0xff]
          %v581 = vld [vmem:[#allocation14 + $0x10] sm:$0xff]
          %v582 = vld [vmem:[#allocation14 + $0x18] sm:$0xff]
          %v583 = vld [vmem:[#allocation14 + $0x20] sm:$0xff]
          %v584 = vld [vmem:[#allocation14 + $0x28] sm:$0xff]
          %v585 = vld [vmem:[#allocation14 + $0x30] sm:$0xff]
          %v586 = vld [vmem:[#allocation14 + $0x38] sm:$0xff]
          %v587 = vld [vmem:[#allocation14 + $0x40] sm:$0xff]
          %v588 = vld [vmem:[#allocation14 + $0x48] sm:$0xff]
          %v589 = vld [vmem:[#allocation14 + $0x50] sm:$0xff]
          %v590 = vld [vmem:[#allocation14 + $0x58] sm:$0xff]
          %v591 = vld [vmem:[#allocation14 + $0x60] sm:$0xff]
          %v592 = vld [vmem:[#allocation14 + $0x68] sm:$0xff]
          %v593 = vld [vmem:[#allocation14 + $0x70] sm:$0xff]
          %v594 = vld [vmem:[#allocation14 + $0x78] sm:$0xff]
          %v595 = vld [vmem:[#allocation14 + $0x80] sm:$0xff]
          %v596 = vld [vmem:[#allocation14 + $0x88] sm:$0xff]
          %v597 = vld [vmem:[#allocation14 + $0x90] sm:$0xff]
          %v598 = vld [vmem:[#allocation14 + $0x98] sm:$0xff]
          %v599 = vld [vmem:[#allocation14 + $0xa0] sm:$0xff]
          %v600 = vld [vmem:[#allocation14 + $0xa8] sm:$0xff]
          %v601 = vld [vmem:[#allocation14 + $0xb0] sm:$0xff]
          %v602 = vld [vmem:[#allocation14 + $0xb8] sm:$0xff]
          %v603 = vld [vmem:[#allocation14 + $0xc0] sm:$0xff]
          %v604 = vld [vmem:[#allocation14 + $0xc8] sm:$0xff]
          %v605 = vld [vmem:[#allocation14 + $0xd0] sm:$0xff]
          %v606 = vld [vmem:[#allocation14 + $0xd8] sm:$0xff]
          %v607 = vld [vmem:[#allocation14 + $0xe0] sm:$0xff]
          %v608 = vld [vmem:[#allocation14 + $0xe8] sm:$0xff]
          %v609 = vld [vmem:[#allocation14 + $0xf0] sm:$0xff]
          %v610 = vld [vmem:[#allocation14 + $0xf8] sm:$0xff]
          %v611 = vld [vmem:[#allocation14 + $0x100] sm:$0xff]
          %v612 = vld [vmem:[#allocation14 + $0x108] sm:$0xff]
          %v613 = vld [vmem:[#allocation14 + $0x110] sm:$0xff]
          %v614 = vld [vmem:[#allocation14 + $0x118] sm:$0xff]
          %v615 = vld [vmem:[#allocation14 + $0x120] sm:$0xff]
          %v616 = vld [vmem:[#allocation14 + $0x128] sm:$0xff]
          %v617 = vld [vmem:[#allocation14 + $0x130] sm:$0xff]
          %v618 = vld [vmem:[#allocation14 + $0x138] sm:$0xff]
          %v619 = vld [vmem:[#allocation14 + $0x140] sm:$0xff]
          %v620 = vld [vmem:[#allocation14 + $0x148] sm:$0xff]
          %v621 = vld [vmem:[#allocation14 + $0x150] sm:$0xff]
          %v622 = vld [vmem:[#allocation14 + $0x158] sm:$0xff]
          %v623 = vld [vmem:[#allocation14 + $0x160] sm:$0xff]
          %v624 = vld [vmem:[#allocation14 + $0x168] sm:$0xff]
          %v625 = vld [vmem:[#allocation14 + $0x170] sm:$0xff]
          %v626 = vld [vmem:[#allocation14 + $0x178] sm:$0xff]
          %v627 = vld [vmem:[#allocation14 + $0x180] sm:$0xff]
          %v628 = vld [vmem:[#allocation14 + $0x188] sm:$0xff]
          %v629 = vld [vmem:[#allocation14 + $0x190] sm:$0xff]
          %v630 = vld [vmem:[#allocation14 + $0x198] sm:$0xff]
          %v631 = vld [vmem:[#allocation14 + $0x1a0] sm:$0xff]
          %v632 = vld [vmem:[#allocation14 + $0x1a8] sm:$0xff]
          %v633 = vld [vmem:[#allocation14 + $0x1b0] sm:$0xff]
          %v634 = vld [vmem:[#allocation14 + $0x1b8] sm:$0xff]
          %v635 = vld [vmem:[#allocation14 + $0x1c0] sm:$0xff]
          %v636 = vld [vmem:[#allocation14 + $0x1c8] sm:$0xff]
          %v637 = vld [vmem:[#allocation14 + $0x1d0] sm:$0xff]
          %v638 = vld [vmem:[#allocation14 + $0x1d8] sm:$0xff]
          %v639 = vld [vmem:[#allocation14 + $0x1e0] sm:$0xff]
          %v640 = vld [vmem:[#allocation14 + $0x1e8] sm:$0xff]
          %v641 = vld [vmem:[#allocation14 + $0x1f0] sm:$0xff]
          %v642 = vld [vmem:[#allocation14 + $0x1f8] sm:$0xff]
          %v643 = vld [vmem:[%s5] sm:$0xf]
          %v645 = vlaneseq
          %v646 = vshrl.u32 %v645, 7
          %v647 = vsub.s32 0, %v646
          %v648 = vrot.slane %v643, %v647
          %v649 = vlaneseq
          %v650 = vshrl.u32 %v649, 7
          %v651 = vsub.s32 1, %v650
          %v652 = vrot.slane %v643, %v651
          %v653 = vlaneseq
          %v654 = vshrl.u32 %v653, 7
          %v655 = vsub.s32 2, %v654
          %v656 = vrot.slane %v643, %v655
          %v657 = vlaneseq
          %v658 = vshrl.u32 %v657, 7
          %v659 = vsub.s32 3, %v658
          %v660 = vrot.slane %v643, %v659
          %v729 = vunpack.c.l.b16 %v579
          %v730 = vunpack.c.h.b16 %v579
          %v731 = vunpack.c.l.b16 %v580
          %v732 = vunpack.c.h.b16 %v580
          %v733 = vunpack.c.l.b16 %v581
          %v734 = vunpack.c.h.b16 %v581
          %v735 = vunpack.c.l.b16 %v582
          %v736 = vunpack.c.h.b16 %v582
          %v737 = vunpack.c.l.b16 %v583
          %v738 = vunpack.c.h.b16 %v583
          %v739 = vunpack.c.l.b16 %v584
          %v740 = vunpack.c.h.b16 %v584
          %v741 = vunpack.c.l.b16 %v585
          %v742 = vunpack.c.h.b16 %v585
          %v743 = vunpack.c.l.b16 %v586
          %v744 = vunpack.c.h.b16 %v586
          %v745 = vunpack.c.l.b16 %v587
          %v746 = vunpack.c.h.b16 %v587
          %v747 = vunpack.c.l.b16 %v588
          %v748 = vunpack.c.h.b16 %v588
          %v749 = vunpack.c.l.b16 %v589
          %v750 = vunpack.c.h.b16 %v589
          %v751 = vunpack.c.l.b16 %v590
          %v752 = vunpack.c.h.b16 %v590
          %v753 = vunpack.c.l.b16 %v591
          %v754 = vunpack.c.h.b16 %v591
          %v755 = vunpack.c.l.b16 %v592
          %v756 = vunpack.c.h.b16 %v592
          %v757 = vunpack.c.l.b16 %v593
          %v758 = vunpack.c.h.b16 %v593
          %v759 = vunpack.c.l.b16 %v594
          %v760 = vunpack.c.h.b16 %v594
          %v761 = vunpack.c.l.b16 %v595
          %v762 = vunpack.c.h.b16 %v595
          %v763 = vunpack.c.l.b16 %v596
          %v764 = vunpack.c.h.b16 %v596
          %v765 = vunpack.c.l.b16 %v597
          %v766 = vunpack.c.h.b16 %v597
          %v767 = vunpack.c.l.b16 %v598
          %v768 = vunpack.c.h.b16 %v598
          %v769 = vunpack.c.l.b16 %v599
          %v770 = vunpack.c.h.b16 %v599
          %v771 = vunpack.c.l.b16 %v600
          %v772 = vunpack.c.h.b16 %v600
          %v773 = vunpack.c.l.b16 %v601
          %v774 = vunpack.c.h.b16 %v601
          %v775 = vunpack.c.l.b16 %v602
          %v776 = vunpack.c.h.b16 %v602
          %v777 = vunpack.c.l.b16 %v603
          %v778 = vunpack.c.h.b16 %v603
          %v779 = vunpack.c.l.b16 %v604
          %v780 = vunpack.c.h.b16 %v604
          %v781 = vunpack.c.l.b16 %v605
          %v782 = vunpack.c.h.b16 %v605
          %v783 = vunpack.c.l.b16 %v606
          %v784 = vunpack.c.h.b16 %v606
          %v785 = vunpack.c.l.b16 %v607
          %v786 = vunpack.c.h.b16 %v607
          %v787 = vunpack.c.l.b16 %v608
          %v788 = vunpack.c.h.b16 %v608
          %v789 = vunpack.c.l.b16 %v609
          %v790 = vunpack.c.h.b16 %v609
          %v791 = vunpack.c.l.b16 %v610
          %v792 = vunpack.c.h.b16 %v610
          %v793 = vunpack.c.l.b16 %v611
          %v794 = vunpack.c.h.b16 %v611
          %v795 = vunpack.c.l.b16 %v612
          %v796 = vunpack.c.h.b16 %v612
          %v797 = vunpack.c.l.b16 %v613
          %v798 = vunpack.c.h.b16 %v613
          %v799 = vunpack.c.l.b16 %v614
          %v800 = vunpack.c.h.b16 %v614
          %v801 = vunpack.c.l.b16 %v615
          %v802 = vunpack.c.h.b16 %v615
          %v803 = vunpack.c.l.b16 %v616
          %v804 = vunpack.c.h.b16 %v616
          %v805 = vunpack.c.l.b16 %v617
          %v806 = vunpack.c.h.b16 %v617
          %v807 = vunpack.c.l.b16 %v618
          %v808 = vunpack.c.h.b16 %v618
          %v809 = vunpack.c.l.b16 %v619
          %v810 = vunpack.c.h.b16 %v619
          %v811 = vunpack.c.l.b16 %v620
          %v812 = vunpack.c.h.b16 %v620
          %v813 = vunpack.c.l.b16 %v621
          %v814 = vunpack.c.h.b16 %v621
          %v815 = vunpack.c.l.b16 %v622
          %v816 = vunpack.c.h.b16 %v622
          %v817 = vunpack.c.l.b16 %v623
          %v818 = vunpack.c.h.b16 %v623
          %v819 = vunpack.c.l.b16 %v624
          %v820 = vunpack.c.h.b16 %v624
          %v821 = vunpack.c.l.b16 %v625
          %v822 = vunpack.c.h.b16 %v625
          %v823 = vunpack.c.l.b16 %v626
          %v824 = vunpack.c.h.b16 %v626
          %v825 = vunpack.c.l.b16 %v627
          %v826 = vunpack.c.h.b16 %v627
          %v827 = vunpack.c.l.b16 %v628
          %v828 = vunpack.c.h.b16 %v628
          %v829 = vunpack.c.l.b16 %v629
          %v830 = vunpack.c.h.b16 %v629
          %v831 = vunpack.c.l.b16 %v630
          %v832 = vunpack.c.h.b16 %v630
          %v833 = vunpack.c.l.b16 %v631
          %v834 = vunpack.c.h.b16 %v631
          %v835 = vunpack.c.l.b16 %v632
          %v836 = vunpack.c.h.b16 %v632
          %v837 = vunpack.c.l.b16 %v633
          %v838 = vunpack.c.h.b16 %v633
          %v839 = vunpack.c.l.b16 %v634
          %v840 = vunpack.c.h.b16 %v634
          %v841 = vunpack.c.l.b16 %v635
          %v842 = vunpack.c.h.b16 %v635
          %v843 = vunpack.c.l.b16 %v636
          %v844 = vunpack.c.h.b16 %v636
          %v845 = vunpack.c.l.b16 %v637
          %v846 = vunpack.c.h.b16 %v637
          %v847 = vunpack.c.l.b16 %v638
          %v848 = vunpack.c.h.b16 %v638
          %v849 = vunpack.c.l.b16 %v639
          %v850 = vunpack.c.h.b16 %v639
          %v851 = vunpack.c.l.b16 %v640
          %v852 = vunpack.c.h.b16 %v640
          %v853 = vunpack.c.l.b16 %v641
          %v854 = vunpack.c.h.b16 %v641
          %v855 = vunpack.c.l.b16 %v642
          %v856 = vunpack.c.h.b16 %v642
          %v857 = vpack.c.b16 %v733, %v729
          %v858 = vpack.c.b16 %v734, %v730
          %v859 = vpack.c.b16 %v735, %v731
          %v860 = vpack.c.b16 %v736, %v732
          %v861 = vpack.c.b16 %v741, %v737
          %v862 = vpack.c.b16 %v742, %v738
          %v863 = vpack.c.b16 %v743, %v739
          %v864 = vpack.c.b16 %v744, %v740
          %v865 = vpack.c.b16 %v749, %v745
          %v866 = vpack.c.b16 %v750, %v746
          %v867 = vpack.c.b16 %v751, %v747
          %v868 = vpack.c.b16 %v752, %v748
          %v869 = vpack.c.b16 %v757, %v753
          %v870 = vpack.c.b16 %v758, %v754
          %v871 = vpack.c.b16 %v759, %v755
          %v872 = vpack.c.b16 %v760, %v756
          %v873 = vpack.c.b16 %v765, %v761
          %v874 = vpack.c.b16 %v766, %v762
          %v875 = vpack.c.b16 %v767, %v763
          %v876 = vpack.c.b16 %v768, %v764
          %v877 = vpack.c.b16 %v773, %v769
          %v878 = vpack.c.b16 %v774, %v770
          %v879 = vpack.c.b16 %v775, %v771
          %v880 = vpack.c.b16 %v776, %v772
          %v881 = vpack.c.b16 %v781, %v777
          %v882 = vpack.c.b16 %v782, %v778
          %v883 = vpack.c.b16 %v783, %v779
          %v884 = vpack.c.b16 %v784, %v780
          %v885 = vpack.c.b16 %v789, %v785
          %v886 = vpack.c.b16 %v790, %v786
          %v887 = vpack.c.b16 %v791, %v787
          %v888 = vpack.c.b16 %v792, %v788
          %v889 = vpack.c.b16 %v797, %v793
          %v890 = vpack.c.b16 %v798, %v794
          %v891 = vpack.c.b16 %v799, %v795
          %v892 = vpack.c.b16 %v800, %v796
          %v893 = vpack.c.b16 %v805, %v801
          %v894 = vpack.c.b16 %v806, %v802
          %v895 = vpack.c.b16 %v807, %v803
          %v896 = vpack.c.b16 %v808, %v804
          %v897 = vpack.c.b16 %v813, %v809
          %v898 = vpack.c.b16 %v814, %v810
          %v899 = vpack.c.b16 %v815, %v811
          %v900 = vpack.c.b16 %v816, %v812
          %v901 = vpack.c.b16 %v821, %v817
          %v902 = vpack.c.b16 %v822, %v818
          %v903 = vpack.c.b16 %v823, %v819
          %v904 = vpack.c.b16 %v824, %v820
          %v905 = vpack.c.b16 %v829, %v825
          %v906 = vpack.c.b16 %v830, %v826
          %v907 = vpack.c.b16 %v831, %v827
          %v908 = vpack.c.b16 %v832, %v828
          %v909 = vpack.c.b16 %v837, %v833
          %v910 = vpack.c.b16 %v838, %v834
          %v911 = vpack.c.b16 %v839, %v835
          %v912 = vpack.c.b16 %v840, %v836
          %v913 = vpack.c.b16 %v845, %v841
          %v914 = vpack.c.b16 %v846, %v842
          %v915 = vpack.c.b16 %v847, %v843
          %v916 = vpack.c.b16 %v848, %v844
          %v917 = vpack.c.b16 %v853, %v849
          %v918 = vpack.c.b16 %v854, %v850
          %v919 = vpack.c.b16 %v855, %v851
          %v920 = vpack.c.b16 %v856, %v852
          %985 = vmatprep.subr.bf16.mxu0 %v886
          %986 = vmatpush1.bf16.msra.mxu0 %v885
          %987 = vmatprep.subr.bf16.mxu0 %v882
          %988 = vmatpush1.bf16.msra.mxu0 %v881
          %989 = vmatprep.subr.bf16.mxu0 %v878
          %990 = vmatpush1.bf16.msra.mxu0 %v877
          %991 = vmatprep.subr.bf16.mxu0 %v874
          %992 = vmatpush1.bf16.msra.mxu0 %v873
          %993 = vmatprep.subr.bf16.mxu0 %v870
          %994 = vmatpush1.bf16.msra.mxu0 %v869
          %995 = vmatprep.subr.bf16.mxu0 %v866
          %996 = vmatpush1.bf16.msra.mxu0 %v865
          %997 = vmatprep.subr.bf16.mxu0 %v862
          %998 = vmatpush1.bf16.msra.mxu0 %v861
          %999 = vmatprep.subr.bf16.mxu0 %v858
          %1000 = vmatpush1.bf16.msra.mxu0 %v857
          %1001 = vmatprep.subr.bf16.mxu0 %v918
          %1002 = vmatpush2.bf16.msra.mxu0 %v917
          %1003 = vmatprep.subr.bf16.mxu0 %v914
          %1004 = vmatpush2.bf16.msra.mxu0 %v913
          %1005 = vmatprep.subr.bf16.mxu0 %v910
          %1006 = vmatpush2.bf16.msra.mxu0 %v909
          %1007 = vmatprep.subr.bf16.mxu0 %v906
          %1008 = vmatpush2.bf16.msra.mxu0 %v905
          %1009 = vmatprep.subr.bf16.mxu0 %v902
          %1010 = vmatpush2.bf16.msra.mxu0 %v901
          %1011 = vmatprep.subr.bf16.mxu0 %v898
          %1012 = vmatpush2.bf16.msra.mxu0 %v897
          %1013 = vmatprep.subr.bf16.mxu0 %v894
          %1014 = vmatpush2.bf16.msra.mxu0 %v893
          %1015 = vmatprep.subr.bf16.mxu0 %v890
          %1016 = vmatpush2.bf16.msra.mxu0 %v889
          %1017 = vmatprep.mubr.bf16.mxu0 %v578
          %1018 = vmatmul.mubr.bf16.gmra.mxu0 %v577
          %v1019 = vpop.f32.mrf.mxu0
          %v1020 = vadd.f32 %v648, %v1019
          %v1021 = vpop.f32.mrf.mxu0
          %v1022 = vadd.f32 %v652, %v1021
          %v1023 = vpop.f32.mrf.mxu0
          %v1024 = vpop.f32.mrf.mxu0
          %1025 = vdwg.mxu0
          %1026 = vmatprep.subr.bf16.mxu0 %v888
          %1027 = vmatpush1.bf16.msra.mxu0 %v887
          %1028 = vmatprep.subr.bf16.mxu0 %v884
          %1029 = vmatpush1.bf16.msra.mxu0 %v883
          %1030 = vmatprep.subr.bf16.mxu0 %v880
          %1031 = vmatpush1.bf16.msra.mxu0 %v879
          %1032 = vmatprep.subr.bf16.mxu0 %v876
          %1033 = vmatpush1.bf16.msra.mxu0 %v875
          %1034 = vmatprep.subr.bf16.mxu0 %v872
          %1035 = vmatpush1.bf16.msra.mxu0 %v871
          %1036 = vmatprep.subr.bf16.mxu0 %v868
          %1037 = vmatpush1.bf16.msra.mxu0 %v867
          %1038 = vmatprep.subr.bf16.mxu0 %v864
          %1039 = vmatpush1.bf16.msra.mxu0 %v863
          %1040 = vmatprep.subr.bf16.mxu0 %v860
          %1041 = vmatpush1.bf16.msra.mxu0 %v859
          %1042 = vmatprep.subr.bf16.mxu0 %v920
          %1043 = vmatpush2.bf16.msra.mxu0 %v919
          %1044 = vmatprep.subr.bf16.mxu0 %v916
          %1045 = vmatpush2.bf16.msra.mxu0 %v915
          %1046 = vmatprep.subr.bf16.mxu0 %v912
          %1047 = vmatpush2.bf16.msra.mxu0 %v911
          %1048 = vmatprep.subr.bf16.mxu0 %v908
          %1049 = vmatpush2.bf16.msra.mxu0 %v907
          %1050 = vmatprep.subr.bf16.mxu0 %v904
          %1051 = vmatpush2.bf16.msra.mxu0 %v903
          %1052 = vmatprep.subr.bf16.mxu0 %v900
          %1053 = vmatpush2.bf16.msra.mxu0 %v899
          %1054 = vmatprep.subr.bf16.mxu0 %v896
          %1055 = vmatpush2.bf16.msra.mxu0 %v895
          %1056 = vmatprep.subr.bf16.mxu0 %v892
          %1057 = vmatpush2.bf16.msra.mxu0 %v891
          %1058 = vmatprep.mubr.bf16.mxu0 %v578
          %1059 = vmatmul.mubr.bf16.gmra.mxu0 %v577
          %v1060 = vpop.f32.mrf.mxu0
          %v1061 = vadd.f32 %v656, %v1060
          %v1062 = vpop.f32.mrf.mxu0
          %v1063 = vadd.f32 %v660, %v1062
          %v1064 = vpop.f32.mrf.mxu0
          %v1065 = vpop.f32.mrf.mxu0
          %1066 = vdwg.mxu0
          %v1067 = vxor.u32 %v1020, 2147483648
          %v1068 = vxor.u32 %v1022, 2147483648
          %v1069 = vxor.u32 %v1061, 2147483648
          %v1070 = vmul.f32 %v1067, 1.442695
          %v1071 = vpow.pop %v1070
          %v1072 = vmul.f32 %v1068, 1.442695
          %v1073 = vpow.pop %v1072
          %v1074 = vmul.f32 %v1069, 1.442695
          %v1075 = vpow.pop %v1074
          %v1076 = vadd.f32 %v1071, 1.0
          %v1077 = vadd.f32 %v1073, 1.0
          %v1078 = vadd.f32 %v1075, 1.0
          %v1079 = vrcp.pop %v1076
          %v1080 = vmul.f32 1.0, %v1079
          %v1081 = vrcp.pop %v1077
          %v1082 = vmul.f32 1.0, %v1081
          %v1083 = vrcp.pop %v1078
          %v1084 = vmul.f32 1.0, %v1083
          %v1085 = vtanh.pop %v1063
          %v1086 = vmul.f32 %v1082, %v576
          %v1087 = vmul.f32 %v1080, %v1085
          %v1088 = vadd.f32 %v1086, %v1087
          %v1089 = vtanh.pop %v1088
          %v1090 = vmul.f32 %v1084, %v1089
          %1091 = vst [vmem:[#allocation19] sm:$0xff] %v1090
          %1092 = vst [vmem:[#allocation21] sm:$0xff] %v1088
          %s1093 = scalar_lea.vmem [#allocation9], 8
          %v1094 = vld [vmem:[%s1093] sm:$0xff]
          %s1095 = scalar_lea.vmem [#allocation12], 8
          %v1096 = vld [vmem:[%s1095] sm:$0xff]
          %v1097 = vpack.c.bf16 %v1090, %v1090
          %v1098 = vpack.c.bf16 %v1094, %v1094
          %s1099 = scalar_lea.vmem [#allocation14], 512
          %v1100 = vld [vmem:[%s1099] sm:$0xff]
          %v1101 = vld [vmem:[%s1099 + $0x8] sm:$0xff]
          %v1102 = vld [vmem:[%s1099 + $0x10] sm:$0xff]
          %v1103 = vld [vmem:[%s1099 + $0x18] sm:$0xff]
          %v1104 = vld [vmem:[%s1099 + $0x20] sm:$0xff]
          %v1105 = vld [vmem:[%s1099 + $0x28] sm:$0xff]
          %v1106 = vld [vmem:[%s1099 + $0x30] sm:$0xff]
          %v1107 = vld [vmem:[%s1099 + $0x38] sm:$0xff]
          %v1108 = vld [vmem:[%s1099 + $0x40] sm:$0xff]
          %v1109 = vld [vmem:[%s1099 + $0x48] sm:$0xff]
          %v1110 = vld [vmem:[%s1099 + $0x50] sm:$0xff]
          %v1111 = vld [vmem:[%s1099 + $0x58] sm:$0xff]
          %v1112 = vld [vmem:[%s1099 + $0x60] sm:$0xff]
          %v1113 = vld [vmem:[%s1099 + $0x68] sm:$0xff]
          %v1114 = vld [vmem:[%s1099 + $0x70] sm:$0xff]
          %v1115 = vld [vmem:[%s1099 + $0x78] sm:$0xff]
          %v1116 = vld [vmem:[%s1099 + $0x80] sm:$0xff]
          %v1117 = vld [vmem:[%s1099 + $0x88] sm:$0xff]
          %v1118 = vld [vmem:[%s1099 + $0x90] sm:$0xff]
          %v1119 = vld [vmem:[%s1099 + $0x98] sm:$0xff]
          %v1120 = vld [vmem:[%s1099 + $0xa0] sm:$0xff]
          %v1121 = vld [vmem:[%s1099 + $0xa8] sm:$0xff]
          %v1122 = vld [vmem:[%s1099 + $0xb0] sm:$0xff]
          %v1123 = vld [vmem:[%s1099 + $0xb8] sm:$0xff]
          %v1124 = vld [vmem:[%s1099 + $0xc0] sm:$0xff]
          %v1125 = vld [vmem:[%s1099 + $0xc8] sm:$0xff]
          %v1126 = vld [vmem:[%s1099 + $0xd0] sm:$0xff]
          %v1127 = vld [vmem:[%s1099 + $0xd8] sm:$0xff]
          %v1128 = vld [vmem:[%s1099 + $0xe0] sm:$0xff]
          %v1129 = vld [vmem:[%s1099 + $0xe8] sm:$0xff]
          %v1130 = vld [vmem:[%s1099 + $0xf0] sm:$0xff]
          %v1131 = vld [vmem:[%s1099 + $0xf8] sm:$0xff]
          %v1132 = vld [vmem:[%s1099 + $0x100] sm:$0xff]
          %v1133 = vld [vmem:[%s1099 + $0x108] sm:$0xff]
          %v1134 = vld [vmem:[%s1099 + $0x110] sm:$0xff]
          %v1135 = vld [vmem:[%s1099 + $0x118] sm:$0xff]
          %v1136 = vld [vmem:[%s1099 + $0x120] sm:$0xff]
          %v1137 = vld [vmem:[%s1099 + $0x128] sm:$0xff]
          %v1138 = vld [vmem:[%s1099 + $0x130] sm:$0xff]
          %v1139 = vld [vmem:[%s1099 + $0x138] sm:$0xff]
          %v1140 = vld [vmem:[%s1099 + $0x140] sm:$0xff]
          %v1141 = vld [vmem:[%s1099 + $0x148] sm:$0xff]
          %v1142 = vld [vmem:[%s1099 + $0x150] sm:$0xff]
          %v1143 = vld [vmem:[%s1099 + $0x158] sm:$0xff]
          %v1144 = vld [vmem:[%s1099 + $0x160] sm:$0xff]
          %v1145 = vld [vmem:[%s1099 + $0x168] sm:$0xff]
          %v1146 = vld [vmem:[%s1099 + $0x170] sm:$0xff]
          %v1147 = vld [vmem:[%s1099 + $0x178] sm:$0xff]
          %v1148 = vld [vmem:[%s1099 + $0x180] sm:$0xff]
          %v1149 = vld [vmem:[%s1099 + $0x188] sm:$0xff]
          %v1150 = vld [vmem:[%s1099 + $0x190] sm:$0xff]
          %v1151 = vld [vmem:[%s1099 + $0x198] sm:$0xff]
          %v1152 = vld [vmem:[%s1099 + $0x1a0] sm:$0xff]
          %v1153 = vld [vmem:[%s1099 + $0x1a8] sm:$0xff]
          %v1154 = vld [vmem:[%s1099 + $0x1b0] sm:$0xff]
          %v1155 = vld [vmem:[%s1099 + $0x1b8] sm:$0xff]
          %v1156 = vld [vmem:[%s1099 + $0x1c0] sm:$0xff]
          %v1157 = vld [vmem:[%s1099 + $0x1c8] sm:$0xff]
          %v1158 = vld [vmem:[%s1099 + $0x1d0] sm:$0xff]
          %v1159 = vld [vmem:[%s1099 + $0x1d8] sm:$0xff]
          %v1160 = vld [vmem:[%s1099 + $0x1e0] sm:$0xff]
          %v1161 = vld [vmem:[%s1099 + $0x1e8] sm:$0xff]
          %v1162 = vld [vmem:[%s1099 + $0x1f0] sm:$0xff]
          %v1163 = vld [vmem:[%s1099 + $0x1f8] sm:$0xff]
          %s1164 = scalar_lea.vmem %s5, 4
          %v1165 = vld [vmem:[%s1164] sm:$0xf]
          %v1167 = vlaneseq
          %v1168 = vshrl.u32 %v1167, 7
          %v1169 = vsub.s32 0, %v1168
          %v1170 = vrot.slane %v1165, %v1169
          %v1171 = vlaneseq
          %v1172 = vshrl.u32 %v1171, 7
          %v1173 = vsub.s32 1, %v1172
          %v1174 = vrot.slane %v1165, %v1173
          %v1175 = vlaneseq
          %v1176 = vshrl.u32 %v1175, 7
          %v1177 = vsub.s32 2, %v1176
          %v1178 = vrot.slane %v1165, %v1177
          %v1179 = vlaneseq
          %v1180 = vshrl.u32 %v1179, 7
          %v1181 = vsub.s32 3, %v1180
          %v1182 = vrot.slane %v1165, %v1181
          %v1251 = vunpack.c.l.b16 %v1100
          %v1252 = vunpack.c.h.b16 %v1100
          %v1253 = vunpack.c.l.b16 %v1101
          %v1254 = vunpack.c.h.b16 %v1101
          %v1255 = vunpack.c.l.b16 %v1102
          %v1256 = vunpack.c.h.b16 %v1102
          %v1257 = vunpack.c.l.b16 %v1103
          %v1258 = vunpack.c.h.b16 %v1103
          %v1259 = vunpack.c.l.b16 %v1104
          %v1260 = vunpack.c.h.b16 %v1104
          %v1261 = vunpack.c.l.b16 %v1105
          %v1262 = vunpack.c.h.b16 %v1105
          %v1263 = vunpack.c.l.b16 %v1106
          %v1264 = vunpack.c.h.b16 %v1106
          %v1265 = vunpack.c.l.b16 %v1107
          %v1266 = vunpack.c.h.b16 %v1107
          %v1267 = vunpack.c.l.b16 %v1108
          %v1268 = vunpack.c.h.b16 %v1108
          %v1269 = vunpack.c.l.b16 %v1109
          %v1270 = vunpack.c.h.b16 %v1109
          %v1271 = vunpack.c.l.b16 %v1110
          %v1272 = vunpack.c.h.b16 %v1110
          %v1273 = vunpack.c.l.b16 %v1111
          %v1274 = vunpack.c.h.b16 %v1111
          %v1275 = vunpack.c.l.b16 %v1112
          %v1276 = vunpack.c.h.b16 %v1112
          %v1277 = vunpack.c.l.b16 %v1113
          %v1278 = vunpack.c.h.b16 %v1113
          %v1279 = vunpack.c.l.b16 %v1114
          %v1280 = vunpack.c.h.b16 %v1114
          %v1281 = vunpack.c.l.b16 %v1115
          %v1282 = vunpack.c.h.b16 %v1115
          %v1283 = vunpack.c.l.b16 %v1116
          %v1284 = vunpack.c.h.b16 %v1116
          %v1285 = vunpack.c.l.b16 %v1117
          %v1286 = vunpack.c.h.b16 %v1117
          %v1287 = vunpack.c.l.b16 %v1118
          %v1288 = vunpack.c.h.b16 %v1118
          %v1289 = vunpack.c.l.b16 %v1119
          %v1290 = vunpack.c.h.b16 %v1119
          %v1291 = vunpack.c.l.b16 %v1120
          %v1292 = vunpack.c.h.b16 %v1120
          %v1293 = vunpack.c.l.b16 %v1121
          %v1294 = vunpack.c.h.b16 %v1121
          %v1295 = vunpack.c.l.b16 %v1122
          %v1296 = vunpack.c.h.b16 %v1122
          %v1297 = vunpack.c.l.b16 %v1123
          %v1298 = vunpack.c.h.b16 %v1123
          %v1299 = vunpack.c.l.b16 %v1124
          %v1300 = vunpack.c.h.b16 %v1124
          %v1301 = vunpack.c.l.b16 %v1125
          %v1302 = vunpack.c.h.b16 %v1125
          %v1303 = vunpack.c.l.b16 %v1126
          %v1304 = vunpack.c.h.b16 %v1126
          %v1305 = vunpack.c.l.b16 %v1127
          %v1306 = vunpack.c.h.b16 %v1127
          %v1307 = vunpack.c.l.b16 %v1128
          %v1308 = vunpack.c.h.b16 %v1128
          %v1309 = vunpack.c.l.b16 %v1129
          %v1310 = vunpack.c.h.b16 %v1129
          %v1311 = vunpack.c.l.b16 %v1130
          %v1312 = vunpack.c.h.b16 %v1130
          %v1313 = vunpack.c.l.b16 %v1131
          %v1314 = vunpack.c.h.b16 %v1131
          %v1315 = vunpack.c.l.b16 %v1132
          %v1316 = vunpack.c.h.b16 %v1132
          %v1317 = vunpack.c.l.b16 %v1133
          %v1318 = vunpack.c.h.b16 %v1133
          %v1319 = vunpack.c.l.b16 %v1134
          %v1320 = vunpack.c.h.b16 %v1134
          %v1321 = vunpack.c.l.b16 %v1135
          %v1322 = vunpack.c.h.b16 %v1135
          %v1323 = vunpack.c.l.b16 %v1136
          %v1324 = vunpack.c.h.b16 %v1136
          %v1325 = vunpack.c.l.b16 %v1137
          %v1326 = vunpack.c.h.b16 %v1137
          %v1327 = vunpack.c.l.b16 %v1138
          %v1328 = vunpack.c.h.b16 %v1138
          %v1329 = vunpack.c.l.b16 %v1139
          %v1330 = vunpack.c.h.b16 %v1139
          %v1331 = vunpack.c.l.b16 %v1140
          %v1332 = vunpack.c.h.b16 %v1140
          %v1333 = vunpack.c.l.b16 %v1141
          %v1334 = vunpack.c.h.b16 %v1141
          %v1335 = vunpack.c.l.b16 %v1142
          %v1336 = vunpack.c.h.b16 %v1142
          %v1337 = vunpack.c.l.b16 %v1143
          %v1338 = vunpack.c.h.b16 %v1143
          %v1339 = vunpack.c.l.b16 %v1144
          %v1340 = vunpack.c.h.b16 %v1144
          %v1341 = vunpack.c.l.b16 %v1145
          %v1342 = vunpack.c.h.b16 %v1145
          %v1343 = vunpack.c.l.b16 %v1146
          %v1344 = vunpack.c.h.b16 %v1146
          %v1345 = vunpack.c.l.b16 %v1147
          %v1346 = vunpack.c.h.b16 %v1147
          %v1347 = vunpack.c.l.b16 %v1148
          %v1348 = vunpack.c.h.b16 %v1148
          %v1349 = vunpack.c.l.b16 %v1149
          %v1350 = vunpack.c.h.b16 %v1149
          %v1351 = vunpack.c.l.b16 %v1150
          %v1352 = vunpack.c.h.b16 %v1150
          %v1353 = vunpack.c.l.b16 %v1151
          %v1354 = vunpack.c.h.b16 %v1151
          %v1355 = vunpack.c.l.b16 %v1152
          %v1356 = vunpack.c.h.b16 %v1152
          %v1357 = vunpack.c.l.b16 %v1153
          %v1358 = vunpack.c.h.b16 %v1153
          %v1359 = vunpack.c.l.b16 %v1154
          %v1360 = vunpack.c.h.b16 %v1154
          %v1361 = vunpack.c.l.b16 %v1155
          %v1362 = vunpack.c.h.b16 %v1155
          %v1363 = vunpack.c.l.b16 %v1156
          %v1364 = vunpack.c.h.b16 %v1156
          %v1365 = vunpack.c.l.b16 %v1157
          %v1366 = vunpack.c.h.b16 %v1157
          %v1367 = vunpack.c.l.b16 %v1158
          %v1368 = vunpack.c.h.b16 %v1158
          %v1369 = vunpack.c.l.b16 %v1159
          %v1370 = vunpack.c.h.b16 %v1159
          %v1371 = vunpack.c.l.b16 %v1160
          %v1372 = vunpack.c.h.b16 %v1160
          %v1373 = vunpack.c.l.b16 %v1161
          %v1374 = vunpack.c.h.b16 %v1161
          %v1375 = vunpack.c.l.b16 %v1162
          %v1376 = vunpack.c.h.b16 %v1162
          %v1377 = vunpack.c.l.b16 %v1163
          %v1378 = vunpack.c.h.b16 %v1163
          %v1379 = vpack.c.b16 %v1255, %v1251
          %v1380 = vpack.c.b16 %v1256, %v1252
          %v1381 = vpack.c.b16 %v1257, %v1253
          %v1382 = vpack.c.b16 %v1258, %v1254
          %v1383 = vpack.c.b16 %v1263, %v1259
          %v1384 = vpack.c.b16 %v1264, %v1260
          %v1385 = vpack.c.b16 %v1265, %v1261
          %v1386 = vpack.c.b16 %v1266, %v1262
          %v1387 = vpack.c.b16 %v1271, %v1267
          %v1388 = vpack.c.b16 %v1272, %v1268
          %v1389 = vpack.c.b16 %v1273, %v1269
          %v1390 = vpack.c.b16 %v1274, %v1270
          %v1391 = vpack.c.b16 %v1279, %v1275
          %v1392 = vpack.c.b16 %v1280, %v1276
          %v1393 = vpack.c.b16 %v1281, %v1277
          %v1394 = vpack.c.b16 %v1282, %v1278
          %v1395 = vpack.c.b16 %v1287, %v1283
          %v1396 = vpack.c.b16 %v1288, %v1284
          %v1397 = vpack.c.b16 %v1289, %v1285
          %v1398 = vpack.c.b16 %v1290, %v1286
          %v1399 = vpack.c.b16 %v1295, %v1291
          %v1400 = vpack.c.b16 %v1296, %v1292
          %v1401 = vpack.c.b16 %v1297, %v1293
          %v1402 = vpack.c.b16 %v1298, %v1294
          %v1403 = vpack.c.b16 %v1303, %v1299
          %v1404 = vpack.c.b16 %v1304, %v1300
          %v1405 = vpack.c.b16 %v1305, %v1301
          %v1406 = vpack.c.b16 %v1306, %v1302
          %v1407 = vpack.c.b16 %v1311, %v1307
          %v1408 = vpack.c.b16 %v1312, %v1308
          %v1409 = vpack.c.b16 %v1313, %v1309
          %v1410 = vpack.c.b16 %v1314, %v1310
          %v1411 = vpack.c.b16 %v1319, %v1315
          %v1412 = vpack.c.b16 %v1320, %v1316
          %v1413 = vpack.c.b16 %v1321, %v1317
          %v1414 = vpack.c.b16 %v1322, %v1318
          %v1415 = vpack.c.b16 %v1327, %v1323
          %v1416 = vpack.c.b16 %v1328, %v1324
          %v1417 = vpack.c.b16 %v1329, %v1325
          %v1418 = vpack.c.b16 %v1330, %v1326
          %v1419 = vpack.c.b16 %v1335, %v1331
          %v1420 = vpack.c.b16 %v1336, %v1332
          %v1421 = vpack.c.b16 %v1337, %v1333
          %v1422 = vpack.c.b16 %v1338, %v1334
          %v1423 = vpack.c.b16 %v1343, %v1339
          %v1424 = vpack.c.b16 %v1344, %v1340
          %v1425 = vpack.c.b16 %v1345, %v1341
          %v1426 = vpack.c.b16 %v1346, %v1342
          %v1427 = vpack.c.b16 %v1351, %v1347
          %v1428 = vpack.c.b16 %v1352, %v1348
          %v1429 = vpack.c.b16 %v1353, %v1349
          %v1430 = vpack.c.b16 %v1354, %v1350
          %v1431 = vpack.c.b16 %v1359, %v1355
          %v1432 = vpack.c.b16 %v1360, %v1356
          %v1433 = vpack.c.b16 %v1361, %v1357
          %v1434 = vpack.c.b16 %v1362, %v1358
          %v1435 = vpack.c.b16 %v1367, %v1363
          %v1436 = vpack.c.b16 %v1368, %v1364
          %v1437 = vpack.c.b16 %v1369, %v1365
          %v1438 = vpack.c.b16 %v1370, %v1366
          %v1439 = vpack.c.b16 %v1375, %v1371
          %v1440 = vpack.c.b16 %v1376, %v1372
          %v1441 = vpack.c.b16 %v1377, %v1373
          %v1442 = vpack.c.b16 %v1378, %v1374
          %1507 = vmatprep.subr.bf16.mxu0 %v1408
          %1508 = vmatpush1.bf16.msra.mxu0 %v1407
          %1509 = vmatprep.subr.bf16.mxu0 %v1404
          %1510 = vmatpush1.bf16.msra.mxu0 %v1403
          %1511 = vmatprep.subr.bf16.mxu0 %v1400
          %1512 = vmatpush1.bf16.msra.mxu0 %v1399
          %1513 = vmatprep.subr.bf16.mxu0 %v1396
          %1514 = vmatpush1.bf16.msra.mxu0 %v1395
          %1515 = vmatprep.subr.bf16.mxu0 %v1392
          %1516 = vmatpush1.bf16.msra.mxu0 %v1391
          %1517 = vmatprep.subr.bf16.mxu0 %v1388
          %1518 = vmatpush1.bf16.msra.mxu0 %v1387
          %1519 = vmatprep.subr.bf16.mxu0 %v1384
          %1520 = vmatpush1.bf16.msra.mxu0 %v1383
          %1521 = vmatprep.subr.bf16.mxu0 %v1380
          %1522 = vmatpush1.bf16.msra.mxu0 %v1379
          %1523 = vmatprep.subr.bf16.mxu0 %v1440
          %1524 = vmatpush2.bf16.msra.mxu0 %v1439
          %1525 = vmatprep.subr.bf16.mxu0 %v1436
          %1526 = vmatpush2.bf16.msra.mxu0 %v1435
          %1527 = vmatprep.subr.bf16.mxu0 %v1432
          %1528 = vmatpush2.bf16.msra.mxu0 %v1431
          %1529 = vmatprep.subr.bf16.mxu0 %v1428
          %1530 = vmatpush2.bf16.msra.mxu0 %v1427
          %1531 = vmatprep.subr.bf16.mxu0 %v1424
          %1532 = vmatpush2.bf16.msra.mxu0 %v1423
          %1533 = vmatprep.subr.bf16.mxu0 %v1420
          %1534 = vmatpush2.bf16.msra.mxu0 %v1419
          %1535 = vmatprep.subr.bf16.mxu0 %v1416
          %1536 = vmatpush2.bf16.msra.mxu0 %v1415
          %1537 = vmatprep.subr.bf16.mxu0 %v1412
          %1538 = vmatpush2.bf16.msra.mxu0 %v1411
          %1539 = vmatprep.mubr.bf16.mxu0 %v1098
          %1540 = vmatmul.mubr.bf16.gmra.mxu0 %v1097
          %v1541 = vpop.f32.mrf.mxu0
          %v1542 = vadd.f32 %v1170, %v1541
          %v1543 = vpop.f32.mrf.mxu0
          %v1544 = vadd.f32 %v1174, %v1543
          %v1545 = vpop.f32.mrf.mxu0
          %v1546 = vpop.f32.mrf.mxu0
          %1547 = vdwg.mxu0
          %1548 = vmatprep.subr.bf16.mxu0 %v1410
          %1549 = vmatpush1.bf16.msra.mxu0 %v1409
          %1550 = vmatprep.subr.bf16.mxu0 %v1406
          %1551 = vmatpush1.bf16.msra.mxu0 %v1405
          %1552 = vmatprep.subr.bf16.mxu0 %v1402
          %1553 = vmatpush1.bf16.msra.mxu0 %v1401
          %1554 = vmatprep.subr.bf16.mxu0 %v1398
          %1555 = vmatpush1.bf16.msra.mxu0 %v1397
          %1556 = vmatprep.subr.bf16.mxu0 %v1394
          %1557 = vmatpush1.bf16.msra.mxu0 %v1393
          %1558 = vmatprep.subr.bf16.mxu0 %v1390
          %1559 = vmatpush1.bf16.msra.mxu0 %v1389
          %1560 = vmatprep.subr.bf16.mxu0 %v1386
          %1561 = vmatpush1.bf16.msra.mxu0 %v1385
          %1562 = vmatprep.subr.bf16.mxu0 %v1382
          %1563 = vmatpush1.bf16.msra.mxu0 %v1381
          %1564 = vmatprep.subr.bf16.mxu0 %v1442
          %1565 = vmatpush2.bf16.msra.mxu0 %v1441
          %1566 = vmatprep.subr.bf16.mxu0 %v1438
          %1567 = vmatpush2.bf16.msra.mxu0 %v1437
          %1568 = vmatprep.subr.bf16.mxu0 %v1434
          %1569 = vmatpush2.bf16.msra.mxu0 %v1433
          %1570 = vmatprep.subr.bf16.mxu0 %v1430
          %1571 = vmatpush2.bf16.msra.mxu0 %v1429
          %1572 = vmatprep.subr.bf16.mxu0 %v1426
          %1573 = vmatpush2.bf16.msra.mxu0 %v1425
          %1574 = vmatprep.subr.bf16.mxu0 %v1422
          %1575 = vmatpush2.bf16.msra.mxu0 %v1421
          %1576 = vmatprep.subr.bf16.mxu0 %v1418
          %1577 = vmatpush2.bf16.msra.mxu0 %v1417
          %1578 = vmatprep.subr.bf16.mxu0 %v1414
          %1579 = vmatpush2.bf16.msra.mxu0 %v1413
          %1580 = vmatprep.mubr.bf16.mxu0 %v1098
          %1581 = vmatmul.mubr.bf16.gmra.mxu0 %v1097
          %v1582 = vpop.f32.mrf.mxu0
          %v1583 = vadd.f32 %v1178, %v1582
          %v1584 = vpop.f32.mrf.mxu0
          %v1585 = vadd.f32 %v1182, %v1584
          %v1586 = vpop.f32.mrf.mxu0
          %v1587 = vpop.f32.mrf.mxu0
          %1588 = vdwg.mxu0
          %v1589 = vxor.u32 %v1542, 2147483648
          %v1590 = vxor.u32 %v1544, 2147483648
          %v1591 = vxor.u32 %v1583, 2147483648
          %v1592 = vmul.f32 %v1589, 1.442695
          %v1593 = vpow.pop %v1592
          %v1594 = vmul.f32 %v1590, 1.442695
          %v1595 = vpow.pop %v1594
          %v1596 = vmul.f32 %v1591, 1.442695
          %v1597 = vpow.pop %v1596
          %v1598 = vadd.f32 %v1593, 1.0
          %v1599 = vadd.f32 %v1595, 1.0
          %v1600 = vadd.f32 %v1597, 1.0
          %v1601 = vrcp.pop %v1598
          %v1602 = vmul.f32 1.0, %v1601
          %v1603 = vrcp.pop %v1599
          %v1604 = vmul.f32 1.0, %v1603
          %v1605 = vrcp.pop %v1600
          %v1606 = vmul.f32 1.0, %v1605
          %v1607 = vtanh.pop %v1585
          %v1608 = vmul.f32 %v1604, %v1096
          %v1609 = vmul.f32 %v1602, %v1607
          %v1610 = vadd.f32 %v1608, %v1609
          %v1611 = vtanh.pop %v1610
          %v1612 = vmul.f32 %v1606, %v1611
          %s1613 = scalar_lea.vmem [#allocation19], 8
          %1614 = vst [vmem:[%s1613] sm:$0xff] %v1612
          %s1615 = scalar_lea.vmem [#allocation21], 8
          %1616 = vst [vmem:[%s1615] sm:$0xff] %v1610
          %v1617 = vpack.c.bf16 %v1612, %v1612
          %1618 = vst [vmem:[#allocation3] sm:$0xf] %v1617
          %vm1619 = vcmask 7168
          %1620 = vst.msk [vmem:[#allocation4] sm:$0xff] %vm1619, -inf
          %1621 = vst.msk [vmem:[#allocation5] sm:$0xff] %vm1619, 0.0
        $region68: #{tpu_custom_call.1} parent=43 // pred_fallthru
          _
        %v1622 = vld [vmem:[#allocation3] sm:$0xf]
        %v1623 = vld [vmem:[%s351] sm:$0xff]
        %v1624 = vld [vmem:[%s351 + $0x8] sm:$0xff]
        %v1625 = vld [vmem:[%s351 + $0x10] sm:$0xff]
        %v1626 = vld [vmem:[%s351 + $0x18] sm:$0xff]
        %v1627 = vld [vmem:[%s351 + $0x20] sm:$0xff]
        %v1628 = vld [vmem:[%s351 + $0x28] sm:$0xff]
        %v1629 = vld [vmem:[%s351 + $0x30] sm:$0xff]
        %v1630 = vld [vmem:[%s351 + $0x38] sm:$0xff]
        %v1631 = vld [vmem:[%s351 + $0x40] sm:$0xff]
        %v1632 = vld [vmem:[%s351 + $0x48] sm:$0xff]
        %v1633 = vld [vmem:[%s351 + $0x50] sm:$0xff]
        %v1634 = vld [vmem:[%s351 + $0x58] sm:$0xff]
        %v1635 = vld [vmem:[%s351 + $0x60] sm:$0xff]
        %v1636 = vld [vmem:[%s351 + $0x68] sm:$0xff]
        %v1637 = vld [vmem:[%s351 + $0x70] sm:$0xff]
        %v1638 = vld [vmem:[%s351 + $0x78] sm:$0xff]
        %v1639 = vld [vmem:[%s360] sm:$0x3]
        %v1641 = vlaneseq
        %v1642 = vshrl.u32 %v1641, 7
        %v1643 = vsub.s32 0, %v1642
        %v1644 = vrot.slane %v1639, %v1643
        %v1645 = vlaneseq
        %v1646 = vshrl.u32 %v1645, 7
        %v1647 = vsub.s32 1, %v1646
        %v1648 = vrot.slane %v1639, %v1647
        %v1667 = vunpack.c.l.b16 %v1623
        %v1668 = vunpack.c.h.b16 %v1623
        %v1669 = vunpack.c.l.b16 %v1624
        %v1670 = vunpack.c.h.b16 %v1624
        %v1671 = vunpack.c.l.b16 %v1625
        %v1672 = vunpack.c.h.b16 %v1625
        %v1673 = vunpack.c.l.b16 %v1626
        %v1674 = vunpack.c.h.b16 %v1626
        %v1675 = vunpack.c.l.b16 %v1627
        %v1676 = vunpack.c.h.b16 %v1627
        %v1677 = vunpack.c.l.b16 %v1628
        %v1678 = vunpack.c.h.b16 %v1628
        %v1679 = vunpack.c.l.b16 %v1629
        %v1680 = vunpack.c.h.b16 %v1629
        %v1681 = vunpack.c.l.b16 %v1630
        %v1682 = vunpack.c.h.b16 %v1630
        %v1683 = vunpack.c.l.b16 %v1631
        %v1684 = vunpack.c.h.b16 %v1631
        %v1685 = vunpack.c.l.b16 %v1632
        %v1686 = vunpack.c.h.b16 %v1632
        %v1687 = vunpack.c.l.b16 %v1633
        %v1688 = vunpack.c.h.b16 %v1633
        %v1689 = vunpack.c.l.b16 %v1634
        %v1690 = vunpack.c.h.b16 %v1634
        %v1691 = vunpack.c.l.b16 %v1635
        %v1692 = vunpack.c.h.b16 %v1635
        %v1693 = vunpack.c.l.b16 %v1636
        %v1694 = vunpack.c.h.b16 %v1636
        %v1695 = vunpack.c.l.b16 %v1637
        %v1696 = vunpack.c.h.b16 %v1637
        %v1697 = vunpack.c.l.b16 %v1638
        %v1698 = vunpack.c.h.b16 %v1638
        %v1699 = vpack.c.b16 %v1669, %v1667
        %v1700 = vpack.c.b16 %v1670, %v1668
        %v1701 = vpack.c.b16 %v1673, %v1671
        %v1702 = vpack.c.b16 %v1674, %v1672
        %v1703 = vpack.c.b16 %v1677, %v1675
        %v1704 = vpack.c.b16 %v1678, %v1676
        %v1705 = vpack.c.b16 %v1681, %v1679
        %v1706 = vpack.c.b16 %v1682, %v1680
        %v1707 = vpack.c.b16 %v1685, %v1683
        %v1708 = vpack.c.b16 %v1686, %v1684
        %v1709 = vpack.c.b16 %v1689, %v1687
        %v1710 = vpack.c.b16 %v1690, %v1688
        %v1711 = vpack.c.b16 %v1693, %v1691
        %v1712 = vpack.c.b16 %v1694, %v1692
        %v1713 = vpack.c.b16 %v1697, %v1695
        %v1714 = vpack.c.b16 %v1698, %v1696
        %1731 = vmatprep.subr.bf16.mxu0 %v1714
        %1732 = vmatpush1.bf16.msra.mxu0 %v1713
        %1733 = vmatprep.subr.bf16.mxu0 %v1712
        %1734 = vmatpush1.bf16.msra.mxu0 %v1711
        %1735 = vmatprep.subr.bf16.mxu0 %v1710
        %1736 = vmatpush1.bf16.msra.mxu0 %v1709
        %1737 = vmatprep.subr.bf16.mxu0 %v1708
        %1738 = vmatpush1.bf16.msra.mxu0 %v1707
        %1739 = vmatprep.subr.bf16.mxu0 %v1706
        %1740 = vmatpush1.bf16.msra.mxu0 %v1705
        %1741 = vmatprep.subr.bf16.mxu0 %v1704
        %1742 = vmatpush1.bf16.msra.mxu0 %v1703
        %1743 = vmatprep.subr.bf16.mxu0 %v1702
        %1744 = vmatpush1.bf16.msra.mxu0 %v1701
        %1745 = vmatprep.subr.bf16.mxu0 %v1700
        %1746 = vmatpush1.bf16.msra.mxu0 %v1699
        %1747 = vmatprep.subr.bf16.mxu0 0
        %1748 = vmatpush2.bf16.msra.mxu0 0
        %1749 = vmatprep.subr.bf16.mxu0 0
        %1750 = vmatpush2.bf16.msra.mxu0 0
        %1751 = vmatprep.subr.bf16.mxu0 0
        %1752 = vmatpush2.bf16.msra.mxu0 0
        %1753 = vmatprep.subr.bf16.mxu0 0
        %1754 = vmatpush2.bf16.msra.mxu0 0
        %1755 = vmatprep.subr.bf16.mxu0 0
        %1756 = vmatpush2.bf16.msra.mxu0 0
        %1757 = vmatprep.subr.bf16.mxu0 0
        %1758 = vmatpush2.bf16.msra.mxu0 0
        %1759 = vmatprep.subr.bf16.mxu0 0
        %1760 = vmatpush2.bf16.msra.mxu0 0
        %1761 = vmatprep.subr.bf16.mxu0 0
        %1762 = vmatpush2.bf16.msra.mxu0 0
        %1763 = vmatprep.mubr.bf16.mxu0 0
        %1764 = vmatmul.mubr.bf16.gmra.mxu0 %v1622
        %v1765 = vpop.f32.mrf.mxu0
        %v1766 = vadd.f32 %v1644, %v1765
        %v1767 = vpop.f32.mrf.mxu0
        %v1768 = vadd.f32 %v1648, %v1767
        %v1769 = vpop.f32.mrf.mxu0
        %v1770 = vpop.f32.mrf.mxu0
        %1771 = vdwg.mxu0
        %s1772 = smul.u32 %s33, 256
        %s1773 = sshra.s32 %s1772, 7
        %s1774 = sand.u32 %s1772, 127
        %s1775 = smul.addr %s1773, 8
        %s1776 = scalar_lea.vmem [#allocation18], %s1775
        %1777 = vst [vmem:[%s1776] sm:$0xff] %v1766
        %1778 = vst [vmem:[%s1776 + $0x8] sm:$0xff] %v1768
        %v1779 = vld [vmem:[#allocation4] sm:$0xff]
        %v1780 = vmax.f32 %v1766, %v1768
        %1781 = vmax.xlane.f32.xlu0 %v1780
        %v1782 = vpop.xlane.xlu0 %1781
        %v1783 = vmax.f32 %v1779, %v1782
        %v1784 = vld [vmem:[#allocation5] sm:$0xff]
        %v1785 = vsub.f32 %v1779, %v1783
        %v1786 = vmul.f32 %v1785, 1.442695
        %v1787 = vpow.pop %v1786
        %v1788 = vmul.f32 %v1784, %v1787
        %1790 = vset.pattern.permute.xlu0 0
        %1791 = vperm.xlu0 %1790, %v1783
        %v1792 = vpop.permute.xlu0 %1791
        %v1794 = vsub.f32 %v1766, %v1792
        %v1795 = vsub.f32 %v1768, %v1792
        %v1796 = vmul.f32 %v1794, 1.442695
        %v1797 = vpow.pop %v1796
        %v1798 = vmul.f32 %v1795, 1.442695
        %v1799 = vpow.pop %v1798
        %v1800 = vadd.f32 %v1797, %v1799
        %1801 = vadd.xlane.f32.xlu0 %v1800
        %v1802 = vpop.xlane.xlu0 %1801
        %v1803 = vadd.f32 %v1788, %v1802
        %vm1804 = vcmask 7168
        %1805 = vst.msk [vmem:[#allocation5] sm:$0xff] %vm1804, %v1803
        %1806 = vst.msk [vmem:[#allocation4] sm:$0xff] %vm1804, %v1783
        %p1807 = scmp.eq.s32.totalorder %s33, 3
        // Predicated region
        $region101: #{tpu_custom_call.1} parent=43 // pred_check
          %p1808 = pneg %p1807
        $region102: #{tpu_custom_call.1} parent=43 // pred_check_branch
          %1810 = sbr.rel (%p1808) target = $region104
        $region103: #{tpu_custom_call.1} parent=43 // pred_region
          %v1811 = vld [vmem:[#allocation5] sm:$0xff]
          %v1812 = vrcp.pop %v1811
          %v1813 = vld [vmem:[#allocation18] sm:$0xff]
          %v1814 = vld [vmem:[#allocation18 + $0x8] sm:$0xff]
          %v1815 = vld [vmem:[#allocation18 + $0x10] sm:$0xff]
          %v1816 = vld [vmem:[#allocation18 + $0x18] sm:$0xff]
          %v1817 = vld [vmem:[#allocation18 + $0x20] sm:$0xff]
          %v1818 = vld [vmem:[#allocation18 + $0x28] sm:$0xff]
          %v1819 = vld [vmem:[#allocation18 + $0x30] sm:$0xff]
          %v1820 = vld [vmem:[#allocation18 + $0x38] sm:$0xff]
          %v1821 = vld [vmem:[#allocation4] sm:$0xff]
          %1823 = vset.pattern.permute.xlu0 0
          %1824 = vperm.xlu0 %1823, %v1821
          %v1825 = vpop.permute.xlu0 %1824
          %v1827 = vsub.f32 %v1813, %v1825
          %v1828 = vsub.f32 %v1814, %v1825
          %v1829 = vsub.f32 %v1815, %v1825
          %v1830 = vsub.f32 %v1816, %v1825
          %v1831 = vsub.f32 %v1817, %v1825
          %v1832 = vsub.f32 %v1818, %v1825
          %v1833 = vsub.f32 %v1819, %v1825
          %v1834 = vsub.f32 %v1820, %v1825
          %v1835 = vmul.f32 %v1827, 1.442695
          %v1836 = vpow.pop %v1835
          %v1837 = vmul.f32 %v1828, 1.442695
          %v1838 = vpow.pop %v1837
          %v1839 = vmul.f32 %v1829, 1.442695
          %v1840 = vpow.pop %v1839
          %v1841 = vmul.f32 %v1830, 1.442695
          %v1842 = vpow.pop %v1841
          %v1843 = vmul.f32 %v1831, 1.442695
          %v1844 = vpow.pop %v1843
          %v1845 = vmul.f32 %v1832, 1.442695
          %v1846 = vpow.pop %v1845
          %v1847 = vmul.f32 %v1833, 1.442695
          %v1848 = vpow.pop %v1847
          %v1849 = vmul.f32 %v1834, 1.442695
          %v1850 = vpow.pop %v1849
          %1852 = vset.pattern.permute.xlu0 0
          %1853 = vperm.xlu0 %1852, %v1812
          %v1854 = vpop.permute.xlu0 %1853
          %v1856 = vmul.f32 %v1836, %v1854
          %v1857 = vmul.f32 %v1838, %v1854
          %v1858 = vmul.f32 %v1840, %v1854
          %v1859 = vmul.f32 %v1842, %v1854
          %v1860 = vmul.f32 %v1844, %v1854
          %v1861 = vmul.f32 %v1846, %v1854
          %v1862 = vmul.f32 %v1848, %v1854
          %v1863 = vmul.f32 %v1850, %v1854
          %1864 = vst [vmem:[#allocation18] sm:$0xff] %v1856
          %1865 = vst [vmem:[#allocation18 + $0x8] sm:$0xff] %v1857
          %1866 = vst [vmem:[#allocation18 + $0x10] sm:$0xff] %v1858
          %1867 = vst [vmem:[#allocation18 + $0x18] sm:$0xff] %v1859
          %1868 = vst [vmem:[#allocation18 + $0x20] sm:$0xff] %v1860
          %1869 = vst [vmem:[#allocation18 + $0x28] sm:$0xff] %v1861
          %1870 = vst [vmem:[#allocation18 + $0x30] sm:$0xff] %v1862
          %1871 = vst [vmem:[#allocation18 + $0x38] sm:$0xff] %v1863
        $region104: #{tpu_custom_call.1} parent=43 // pred_fallthru
          _
        // Predicated region
        $region105: #{tpu_custom_call.1} parent=43 // pred_check
          %p1872 = pneg %p182
        $region106: #{tpu_custom_call.1} parent=43 // pred_check_branch
          %1874 = sbr.rel (%p1872) target = $region108
        $region107: #{tpu_custom_call.1} parent=43 // pred_region
          %s1876 = ssub.s32 1024, 1024
          %1877 = vsyncadd [#allocation11], %s1876
          %s1879 = sshll.u32 [#allocation18], 4
          %s1880 = int_to_ptr.vmem [resolvable:$true] %s1879
          %1882 = dma.vmem_to_hbm [thread:$0]  %s1880, 1024, %s8, [#allocation11]
        $region108: #{tpu_custom_call.1} parent=43 // pred_fallthru
          _
        // Predicated region
        $region109: #{tpu_custom_call.1} parent=43 // pred_check
          %p1883 = pneg %p203
        $region110: #{tpu_custom_call.1} parent=43 // pred_check_branch
          %1885 = sbr.rel (%p1883) target = $region112
        $region111: #{tpu_custom_call.1} parent=43 // pred_region
          %s1887 = ssub.s32 256, 256
          %1888 = vsyncadd [#allocation20], %s1887
          %s1889 = sshll.u32 [#allocation19], 4
          %s1890 = int_to_ptr.vmem [resolvable:$true] %s1889
          %1895 = dma.vmem_to_hbm [thread:$0]  %s1890, 256, %s9, [#allocation20], 128, 128, 8
        $region112: #{tpu_custom_call.1} parent=43 // pred_fallthru
          _
        // Predicated region
        $region113: #{tpu_custom_call.1} parent=43 // pred_check
          %p1896 = pneg %p224
        $region114: #{tpu_custom_call.1} parent=43 // pred_check_branch
          %1898 = sbr.rel (%p1896) target = $region116
        $region115: #{tpu_custom_call.1} parent=43 // pred_region
          %s1900 = ssub.s32 256, 256
          %1901 = vsyncadd [#allocation20], %s1900
          %s1902 = sshll.u32 [#allocation21], 4
          %s1903 = int_to_ptr.vmem [resolvable:$true] %s1902
          %1908 = dma.vmem_to_hbm [thread:$0]  %s1903, 256, %s10, [#allocation20], 128, 128, 8
        $region116: #{tpu_custom_call.1} parent=43 // pred_fallthru
          _
        // Predicated region
        $region117: #{tpu_custom_call.1} parent=43 // pred_check
          %p1909 = pneg %p182
        $region118: #{tpu_custom_call.1} parent=43 // pred_check_branch
          %1911 = sbr.rel (%p1909) target = $region120
        $region119: #{tpu_custom_call.1} parent=43 // pred_region
          %1912 = dma.done [#allocation11], 1024
        $region120: #{tpu_custom_call.1} parent=43 // pred_fallthru
          _
        // Predicated region
        $region121: #{tpu_custom_call.1} parent=43 // pred_check
          %p1913 = pneg %p203
        $region122: #{tpu_custom_call.1} parent=43 // pred_check_branch
          %1915 = sbr.rel (%p1913) target = $region124
        $region123: #{tpu_custom_call.1} parent=43 // pred_region
          %1916 = dma.done [#allocation20], 256
        $region124: #{tpu_custom_call.1} parent=43 // pred_fallthru
          _
        // Predicated region
        $region125: #{tpu_custom_call.1} parent=43 // pred_check
          %p1917 = pneg %p224
        $region126: #{tpu_custom_call.1} parent=43 // pred_check_branch
          %1919 = sbr.rel (%p1917) target = $region128
        $region127: #{tpu_custom_call.1} parent=43 // pred_region
          %1920 = dma.done [#allocation20], 256
        $region128: #{tpu_custom_call.1} parent=43 // pred_fallthru
          _
      $region44: #{tpu_custom_call.1} parent=5 // pred_fallthru
        _
      %p1921 = scmp.le.s32.totalorder 2, %s28
      // Predicated region
      $region129: #{tpu_custom_call.1} parent=5 // pred_check
        %p1922 = pneg %p1921
      $region130: #{tpu_custom_call.1} parent=5 // pred_check_branch
        %1924 = sbr.rel (%p1922) target = $region132
      $region131: #{tpu_custom_call.1} parent=5 // pred_region
        %s1925 = ssub.s32 %s28, 2
      $region132: #{tpu_custom_call.1} parent=5 // pred_fallthru
        _
    $region6: #{tpu_custom_call.1} parent=1 // loop_footer
      %s32 = sadd.s32 1, %s28
    $region7: #{tpu_custom_call.1} parent=1 // loop_footer_branch
      %27 = sbr.rel target = $region3
    $region8: #{tpu_custom_call.1} parent=1 // loop_exit
      _
    %1926 = vsyncpa [#allocation10], 1
    %s1927 = scalar_lea.sflag [#allocation10], 1
    %1928 = vsyncpa %s1927, 1
    %1929 = vsyncpa [#allocation13], 1
    %1930 = vsyncpa [#allocation16], 1
    %s1931 = scalar_lea.sflag [#allocation16], 1
    %1932 = vsyncpa %s1931, 1
    %1933 = vsyncpa [#allocation11], 1
    %s1934 = scalar_lea.sflag [#allocation11], 1
    %1935 = vsyncpa %s1934, 1
    %1936 = vsyncpa [#allocation20], 1
  %1937 = vsyncmov [#allocation6]
  %s1938 = vpop.sfrf %1937
  %p1939 = scmp.eq.s32.totalorder %s1938, 0
  %p1940 = pneg %p1939
  %1942 = shalt.err (%p1940)
  %s1943 = scalar_lea.sflag [#allocation6], 1
  %1944 = vsyncmov %s1943
  %s1945 = vpop.sfrf %1944
  %p1946 = scmp.eq.s32.totalorder %s1945, 0
  %p1947 = pneg %p1946
  %1949 = shalt.err (%p1947)
  %s1950 = scalar_lea.sflag [#allocation6], 2
  %1951 = vsyncmov %s1950
  %s1952 = vpop.sfrf %1951
  %p1953 = scmp.eq.s32.totalorder %s1952, 0
  %p1954 = pneg %p1953
  %1956 = shalt.err (%p1954)
  %s1957 = scalar_lea.sflag [#allocation6], 3
  %1958 = vsyncmov %s1957
  %s1959 = vpop.sfrf %1958
  %p1960 = scmp.eq.s32.totalorder %s1959, 0
  %p1961 = pneg %p1960
  %1963 = shalt.err (%p1961)
  %s1964 = scalar_lea.sflag [#allocation6], 4
  %1965 = vsyncmov %s1964
  %s1966 = vpop.sfrf %1965
  %p1967 = scmp.eq.s32.totalorder %s1966, 0
  %p1968 = pneg %p1967
  %1970 = shalt.err (%p1968)
  %s1971 = scalar_lea.sflag [#allocation6], 5
  %1972 = vsyncmov %s1971
  %s1973 = vpop.sfrf %1972
  %p1974 = scmp.eq.s32.totalorder %s1973, 0
  %p1975 = pneg %p1974
  %1977 = shalt.err (%p1975)
  %s1978 = scalar_lea.sflag [#allocation6], 6
  %1979 = vsyncmov %s1978
  %s1980 = vpop.sfrf %1979
  %p1981 = scmp.eq.s32.totalorder %s1980, 0
  %p1982 = pneg %p1981
  %1984 = shalt.err (%p1982)
  %s1985 = scalar_lea.sflag [#allocation6], 7
  %1986 = vsyncmov %s1985
  %s1987 = vpop.sfrf %1986
  %p1988 = scmp.eq.s32.totalorder %s1987, 0
  %p1989 = pneg %p1988
  %1991 = shalt.err (%p1989)

</llo_original>
